<compile_context>
chip_gen: v5e
topology: v5e:2x2
jax: 0.10.0
libtpu: 0.0.40
codegen_flags: <defaults>
</compile_context>

<pallas_src>
import functools
import math

import jax
import jax.numpy as jnp
from jax.experimental import pallas as pl
from jax.experimental.pallas import tpu as pltpu

HEADS = 3
DIM_HEAD = 64
LN_EPS = 1e-5
INNER = HEADS * DIM_HEAD          # 192
PARAM_DTYPE = jnp.bfloat16        # MXU operand dtype for the big projections

_M_MIN = 128                      # minimum matmul M worth feeding the MXU (v5e)
_M_TARGET = 256                   # M target for the 256-row MXUs (v6e / v7x)
_MIN_STEPS = 4                    # grid steps wanted for pipeline / megacore


# --------------------------------- kernel ----------------------------------
def _block_kernel(x_ref, gamma_ref, beta_ref, wqkv_ref, wout_ref, bout_ref,
                  o_ref, *, G, B, C):
    """One grid step = G chunks of size C: pre-norm MHSA block with residual.

    x_ref : (B*G, C) or (B, G, C)        b-major rows of G chunks
    gamma/beta/bout : (1, C)             LayerNorm affine / out-proj bias
    wqkv  : (C, 3*HEADS*DIM_HEAD) bf16   fused Q|K|V projection
    wout  : (HEADS*DIM_HEAD, C)   bf16   fused output projection
    o_ref : same shape as x_ref
    """
    M = B * G
    # b-major rows: a no-op for the 2-D spec, and a tile-aligned leading-dim
    # merge for the 3-D spec (G % 8 == 0 there) -- no per-chunk restack.
    x2 = x_ref[...].reshape(M, C)

    # ---- LayerNorm over the feature dim C (f32, torch default eps) ----
    mean = jnp.mean(x2, axis=-1, keepdims=True)
    xc = x2 - mean
    var = jnp.mean(xc * xc, axis=-1, keepdims=True)
    xn = xc * jax.lax.rsqrt(var + LN_EPS) * gamma_ref[...] + beta_ref[...]

    # ---- fused QKV projection: one (M, C) x (C, 576) matmul (bf16 -> f32) ----
    qkv = jnp.dot(xn.astype(wqkv_ref.dtype), wqkv_ref[...],
                  preferred_element_type=jnp.float32)              # (M, 576)

    # Single NARROW relayout to chunk-major: the chunk index g becomes the
    # batch dim of the score / PV matmuls (sequence length = B).
    qkvT = pltpu.einshape("bgf->gbf", qkv.reshape(B, G, 3 * INNER))  # (G,B,576)

    wout = wout_ref[...]                                            # (192, C)
    scale = 1.0 / (DIM_HEAD ** 0.5)

    # Residual + out-proj bias; per-head out-proj partials accumulate into y,
    # so there is no head-concatenate and head outputs die immediately.
    # NOTE: scores are (G, B, B); if production B is small the softmax path is
    # lane-sparse (see review) -- not folded here to keep the layout simple.
    y = x2 + bout_ref[...]                                          # (M, C) f32
    for h in range(HEADS):                                          # static
        q = qkvT[:, :, h * DIM_HEAD:(h + 1) * DIM_HEAD]
        k = qkvT[:, :, INNER + h * DIM_HEAD:INNER + (h + 1) * DIM_HEAD]
        v = qkvT[:, :, 2 * INNER + h * DIM_HEAD:2 * INNER + (h + 1) * DIM_HEAD]

        s = jnp.einsum("gqd,gkd->gqk",
                       q.astype(jnp.bfloat16), k.astype(jnp.bfloat16),
                       preferred_element_type=jnp.float32) * scale   # (G,B,B)
        s = s - jnp.max(s, axis=-1, keepdims=True)
        p = jnp.exp(s)
        p = p * pl.reciprocal(jnp.sum(p, axis=-1, keepdims=True), approx=True)

        oh = jnp.einsum("gqk,gkd->gqd",
                        p.astype(jnp.bfloat16), v.astype(jnp.bfloat16),
                        preferred_element_type=jnp.float32)          # (G,B,Dh)
        # Back to b-major rows (narrow relayout) and accumulate the out-proj.
        oh_b = pltpu.einshape("gbd->bgd", oh).reshape(M, DIM_HEAD)
        y = y + jnp.dot(oh_b.astype(wout.dtype),
                        wout[h * DIM_HEAD:(h + 1) * DIM_HEAD, :],
                        preferred_element_type=jnp.float32)

    o_ref[...] = y.reshape(o_ref.shape).astype(o_ref.dtype)


# ------------------------------ tiling logic --------------------------------
@functools.lru_cache(maxsize=None)
def _vmem_capacity_bytes():
    try:
        return int(pltpu.get_tpu_info().vmem_capacity_bytes)
    except Exception:
        return 64 << 20           # conservative fallback (v7x per-core VMEM)


def _choose_G(n_chunks, B, C, vmem_budget_bytes):
    """Chunks folded into one grid step.

    Priorities (perf review): (1) M = G*B of the fused projections reaches
    ~128-512 rows, (2) >= 4 grid steps so the block DMA pipeline / both v7x
    TensorCores have work, (3) pipelined blocks + f32 temporaries stay inside
    the per-generation VMEM budget.  G must divide n_chunks and respect the
    (8, 128) BlockSpec rule (G % 8 == 0, or take the chunk dim whole).
    """
    valid = [g for g in range(1, n_chunks + 1)
             if n_chunks % g == 0 and (g % 8 == 0 or g == n_chunks)]

    def vmem_est(g):
        blk = B * g * C * 4                    # one f32 (B, G, C) block
        qkv = B * g * 3 * INNER * 4            # f32 qkv slab (+ chunk-major copy)
        return 4 * blk + 3 * blk + 2 * qkv     # 2x in + 2x out pipelined + temps

    feasible = [g for g in valid if vmem_est(g) <= vmem_budget_bytes]
    if not feasible:                           # huge problem: smallest legal block
        feasible = valid[:1]

    def score(g):
        m, steps = g * B, n_chunks // g
        return (min(m, _M_MIN),                # first reach ~128 rows
                steps >= _MIN_STEPS,           # then keep the pipeline fed
                min(m, _M_TARGET),             # then grow toward 256 rows
                -g)                            # then prefer more / smaller steps
    return max(feasible, key=score)


# -------------------------------- parameters --------------------------------
def init_params(key, C, dtype=PARAM_DTYPE):
    """Deterministic params for the assumed Block(C, HEADS, DIM_HEAD).

    Q/K/V weights are pre-fused into one (C, 3*HEADS*DIM_HEAD) matrix laid out
    as [q_h0..q_h2 | k_h0..k_h2 | v_h0..v_h2]; the output projection is one
    (HEADS*DIM_HEAD, C) matrix with an f32 bias.
    """
    k1, k2 = jax.random.split(key, 2)
    wqkv = (jax.random.normal(k1, (C, 3 * INNER), jnp.float32)
            * (1.0 / jnp.sqrt(C)))
    wout = (jax.random.normal(k2, (INNER, C), jnp.float32)
            * (1.0 / jnp.sqrt(INNER)))
    return dict(
        gamma=jnp.ones((1, C), jnp.float32),
        beta=jnp.zeros((1, C), jnp.float32),
        wqkv=wqkv.astype(dtype),
        wout=wout.astype(dtype),
        bout=jnp.zeros((1, C), jnp.float32),
    )


# --------------------------------- wrapper ----------------------------------
@functools.partial(jax.jit, static_argnames=("C",))
def shuffle_attention_2d(x, params, *, C):
    """Forward pass of ShuffleAttention2d.  x: (B, Ci, H, W) float32 (NCHW)."""
    B = x.shape[0]
    D = math.prod(x.shape[1:])
    assert D % C == 0, "flattened feature size must be divisible by C"
    assert C % 128 == 0, "chunk size must be a multiple of 128 lanes"
    n_chunks = D // C

    cap = _vmem_capacity_bytes()
    G = _choose_G(n_chunks, B, C, vmem_budget_bytes=max(8 << 20, cap // 4))
    n_steps = n_chunks // G
    vmem_limit = int(max(min(cap * 3 // 4, 100 << 20), 32 << 20))

    kernel = functools.partial(_block_kernel, G=G, B=B, C=C)

    if G == n_chunks:
        # Single step over chunks: the flat row-major (B*n_chunks, C) view is
        # already the b-major (M, C) matrix the kernel wants -> zero relayout.
        x_in = x.reshape(B * n_chunks, C)
        blk = (B * n_chunks, C)
        idx = lambda i: (0, 0)
        out_shape = jax.ShapeDtypeStruct((B * n_chunks, C), x.dtype)
    else:
        # Multi-step: 3-D (B, G, C) blocks slice G chunks per step; the
        # in-kernel (B, G, C) -> (B*G, C) merge is tile-aligned (G % 8 == 0).
        x_in = x.reshape(B, n_chunks, C)
        blk = (B, G, C)
        idx = lambda i: (0, i, 0)
        out_shape = jax.ShapeDtypeStruct((B, n_chunks, C), x.dtype)

    const = lambda shape: pl.BlockSpec(shape, lambda i: (0, 0))

    out = pl.pallas_call(
        kernel,
        out_shape=out_shape,
        grid_spec=pltpu.PrefetchScalarGridSpec(
            num_scalar_prefetch=0,
            grid=(n_steps,),
            in_specs=[
                pl.BlockSpec(blk, idx),          # x block (b-major rows)
                const((1, C)),                   # gamma
                const((1, C)),                   # beta
                const((C, 3 * INNER)),           # fused wqkv (bf16)
                const((INNER, C)),               # fused wout (bf16)
                const((1, C)),                   # bout
            ],
            out_specs=pl.BlockSpec(blk, idx),
        ),
        compiler_params=pltpu.CompilerParams(
            dimension_semantics=("parallel",),
            vmem_limit_bytes=vmem_limit),
    )(x_in, params["gamma"], params["beta"], params["wqkv"],
      params["wout"], params["bout"])

    return out.reshape(x.shape)                  # free reshape back to NCHW


# ----------------------- pure-JAX reference (for checking) ------------------
def _reference_forward(x, params, C):
    B = x.shape[0]
    D = x.size // B
    n_chunks = D // C
    xg = x.reshape(B, n_chunks, C).transpose(1, 0, 2)          # (n_chunks,B,C)

    mean = jnp.mean(xg, -1, keepdims=True)
    xc = xg - mean
    var = jnp.mean(xc * xc, -1, keepdims=True)
    xn = xc * jax.lax.rsqrt(var + LN_EPS) * params["gamma"][0] + params["beta"][0]

    qkv = jnp.einsum("gbc,cf->gbf", xn.astype(params["wqkv"].dtype),
                     params["wqkv"], preferred_element_type=jnp.float32)
    q = qkv[..., :INNER].reshape(n_chunks, B, HEADS, DIM_HEAD)
    k = qkv[..., INNER:2 * INNER].reshape(n_chunks, B, HEADS, DIM_HEAD)
    v = qkv[..., 2 * INNER:].reshape(n_chunks, B, HEADS, DIM_HEAD)

    # Mirror the kernel's bf16 operand policy (f32 accumulation).
    s = jnp.einsum("gqhd,gkhd->ghqk",
                   q.astype(jnp.bfloat16), k.astype(jnp.bfloat16),
                   preferred_element_type=jnp.float32) / (DIM_HEAD ** 0.5)
    p = jax.nn.softmax(s, axis=-1)
    o = jnp.einsum("ghqk,gkhd->gqhd",
                   p.astype(jnp.bfloat16), v.astype(jnp.bfloat16),
                   preferred_element_type=jnp.float32).reshape(n_chunks, B, INNER)
    proj = jnp.einsum("gbf,fc->gbc", o.astype(params["wout"].dtype),
                      params["wout"], preferred_element_type=jnp.float32)
    y = xg + proj + params["bout"][0]
    return y.transpose(1, 0, 2).reshape(x.shape)


if __name__ == "__main__":
    key = jax.random.PRNGKey(0)
    kx, kp = jax.random.split(key)

    # Small, consistent shapes: B=2, Ci=4, H=W=16 -> D = 1024, chunk size C=256.
    B, Ci, H, W = 2, 4, 16, 16
    C = 256

    x = jax.random.normal(kx, (B, Ci, H, W), jnp.float32)
    params = init_params(kp, C)

    y = shuffle_attention_2d(x, params, C=C)
    jax.block_until_ready(y)

    assert y.shape == x.shape and y.dtype == x.dtype
    assert bool(jnp.all(jnp.isfinite(y)))

    y_ref = _reference_forward(x, params, C)
    max_err = float(jnp.max(jnp.abs(y - y_ref)))
    assert max_err < 5e-2, f"mismatch vs reference: max abs err {max_err}"

    print("KERNEL_OK")
</pallas_src>

<mosaic_0001>
module attributes {stable_mosaic.version = 11 : i64} {
  func.func @_block_kernel(%arg0: i32, %arg1: memref<8x256xf32, #tpu.memory_space<vmem>>, %arg2: memref<1x256xf32, #tpu.memory_space<vmem>>, %arg3: memref<1x256xf32, #tpu.memory_space<vmem>>, %arg4: memref<256x576xbf16, #tpu.memory_space<vmem>>, %arg5: memref<192x256xbf16, #tpu.memory_space<vmem>>, %arg6: memref<1x256xf32, #tpu.memory_space<vmem>>, %arg7: memref<8x256xf32, #tpu.memory_space<vmem>>) attributes {dimension_semantics = [#tpu.dimension_semantics<parallel>], iteration_bounds = array<i64: 1>, scalar_prefetch = 0 : i64, scratch_operands = 0 : i64, tpu.core_type = #tpu.core_type<tc>, window_params = [{pipeline_mode = #tpu.pipeline_mode<synchronous>, transform_indices = @transform_0, window_bounds = array<i64: 8, 256>}, {pipeline_mode = #tpu.pipeline_mode<synchronous>, transform_indices = @transform_1, window_bounds = array<i64: 1, 256>}, {pipeline_mode = #tpu.pipeline_mode<synchronous>, transform_indices = @transform_2, window_bounds = array<i64: 1, 256>}, {pipeline_mode = #tpu.pipeline_mode<synchronous>, transform_indices = @transform_3, window_bounds = array<i64: 256, 576>}, {pipeline_mode = #tpu.pipeline_mode<synchronous>, transform_indices = @transform_4, window_bounds = array<i64: 192, 256>}, {pipeline_mode = #tpu.pipeline_mode<synchronous>, transform_indices = @transform_5, window_bounds = array<i64: 1, 256>}, {pipeline_mode = #tpu.pipeline_mode<synchronous>, transform_indices = @transform_6, window_bounds = array<i64: 8, 256>}]} {
    %c0 = arith.constant 0 : index
    %c0_0 = arith.constant 0 : index
    %0 = vector.load %arg1[%c0, %c0_0] : memref<8x256xf32, #tpu.memory_space<vmem>>, vector<8x256xf32>
    %cst = arith.constant dense<0.000000e+00> : vector<8xf32>
    %1 = vector.multi_reduction <add>, %0, %cst [1] : vector<8x256xf32> to vector<8xf32>
    %2 = vector.shape_cast %1 : vector<8xf32> to vector<8x1xf32>
    %cst_1 = arith.constant 2.560000e+02 : f32
    %3 = vector.broadcast %cst_1 : f32 to vector<8x1xf32>
    %4 = arith.divf %2, %3 : vector<8x1xf32>
    %5 = vector.broadcast %4 : vector<8x1xf32> to vector<8x256xf32>
    %6 = arith.subf %0, %5 : vector<8x256xf32>
    %7 = arith.mulf %6, %6 : vector<8x256xf32>
    %cst_2 = arith.constant dense<0.000000e+00> : vector<8xf32>
    %8 = vector.multi_reduction <add>, %7, %cst_2 [1] : vector<8x256xf32> to vector<8xf32>
    %9 = vector.shape_cast %8 : vector<8xf32> to vector<8x1xf32>
    %cst_3 = arith.constant 2.560000e+02 : f32
    %10 = vector.broadcast %cst_3 : f32 to vector<8x1xf32>
    %11 = arith.divf %9, %10 : vector<8x1xf32>
    %cst_4 = arith.constant 9.99999974E-6 : f32
    %12 = vector.broadcast %cst_4 : f32 to vector<8x1xf32>
    %13 = arith.addf %11, %12 : vector<8x1xf32>
    %14 = math.rsqrt %13 : vector<8x1xf32>
    %15 = vector.broadcast %14 : vector<8x1xf32> to vector<8x256xf32>
    %16 = arith.mulf %6, %15 : vector<8x256xf32>
    %c0_5 = arith.constant 0 : index
    %c0_6 = arith.constant 0 : index
    %17 = vector.load %arg2[%c0_5, %c0_6] : memref<1x256xf32, #tpu.memory_space<vmem>>, vector<1x256xf32>
    %18 = vector.broadcast %17 : vector<1x256xf32> to vector<8x256xf32>
    %19 = arith.mulf %16, %18 : vector<8x256xf32>
    %c0_7 = arith.constant 0 : index
    %c0_8 = arith.constant 0 : index
    %20 = vector.load %arg3[%c0_7, %c0_8] : memref<1x256xf32, #tpu.memory_space<vmem>>, vector<1x256xf32>
    %21 = vector.broadcast %20 : vector<1x256xf32> to vector<8x256xf32>
    %22 = arith.addf %19, %21 : vector<8x256xf32>
    %23 = arith.truncf %22 : vector<8x256xf32> to vector<8x256xbf16>
    %c0_9 = arith.constant 0 : index
    %c0_10 = arith.constant 0 : index
    %24 = vector.load %arg4[%c0_9, %c0_10] : memref<256x576xbf16, #tpu.memory_space<vmem>>, vector<256x576xbf16>
    %cst_11 = arith.constant dense<0.000000e+00> : vector<8x576xf32>
    %25 = tpu.matmul %23, %24, %cst_11 {dimension_numbers = #tpu.dot_dimension_numbers<[1], [0], [0], [1], [0, 0, 1, 1], [], []>} : vector<8x256xbf16>, vector<256x576xbf16>, vector<8x576xf32> -> vector<8x576xf32>
    %26 = vector.shape_cast %25 : vector<8x576xf32> to vector<2x4x576xf32>
    %27 = tpu.transpose %26, [1, 0, 2] : vector<2x4x576xf32> -> vector<4x2x576xf32>
    %c0_12 = arith.constant 0 : index
    %c0_13 = arith.constant 0 : index
    %28 = vector.load %arg5[%c0_12, %c0_13] : memref<192x256xbf16, #tpu.memory_space<vmem>>, vector<192x256xbf16>
    %c0_14 = arith.constant 0 : index
    %c0_15 = arith.constant 0 : index
    %29 = vector.load %arg6[%c0_14, %c0_15] : memref<1x256xf32, #tpu.memory_space<vmem>>, vector<1x256xf32>
    %30 = vector.broadcast %29 : vector<1x256xf32> to vector<8x256xf32>
    %31 = arith.addf %0, %30 : vector<8x256xf32>
    %32 = vector.extract_strided_slice %27 {offsets = [0, 0, 0], sizes = [4, 2, 64], strides = [1, 1, 1]} : vector<4x2x576xf32> to vector<4x2x64xf32>
    %33 = vector.extract_strided_slice %27 {offsets = [0, 0, 192], sizes = [4, 2, 64], strides = [1, 1, 1]} : vector<4x2x576xf32> to vector<4x2x64xf32>
    %34 = vector.extract_strided_slice %27 {offsets = [0, 0, 384], sizes = [4, 2, 64], strides = [1, 1, 1]} : vector<4x2x576xf32> to vector<4x2x64xf32>
    %35 = arith.truncf %32 : vector<4x2x64xf32> to vector<4x2x64xbf16>
    %36 = arith.truncf %33 : vector<4x2x64xf32> to vector<4x2x64xbf16>
    "tpu.trace_start"() <{level = 10 : i32, message = "gqd,gkd->gqk"}> : () -> ()
    %cst_16 = arith.constant dense<0.000000e+00> : vector<4x2x2xf32>
    %37 = tpu.matmul %35, %36, %cst_16 {dimension_numbers = #tpu.dot_dimension_numbers<[2], [2], [1], [1], [0, 0, 0, 1, 1, 1], [0], [0]>} : vector<4x2x64xbf16>, vector<4x2x64xbf16>, vector<4x2x2xf32> -> vector<4x2x2xf32>
    "tpu.trace_stop"() : () -> ()
    %cst_17 = arith.constant 1.250000e-01 : f32
    %38 = vector.broadcast %cst_17 : f32 to vector<4x2x2xf32>
    %39 = arith.mulf %37, %38 : vector<4x2x2xf32>
    %cst_18 = arith.constant dense<0xFF800000> : vector<4x2xf32>
    %40 = vector.multi_reduction <maximumf>, %39, %cst_18 [2] : vector<4x2x2xf32> to vector<4x2xf32>
    %41 = vector.shape_cast %40 : vector<4x2xf32> to vector<4x2x1xf32>
    %42 = vector.broadcast %41 : vector<4x2x1xf32> to vector<4x2x2xf32>
    %43 = arith.subf %39, %42 : vector<4x2x2xf32>
    %44 = math.exp %43 : vector<4x2x2xf32>
    %cst_19 = arith.constant dense<0.000000e+00> : vector<4x2xf32>
    %45 = vector.multi_reduction <add>, %44, %cst_19 [2] : vector<4x2x2xf32> to vector<4x2xf32>
    %46 = vector.shape_cast %45 : vector<4x2xf32> to vector<4x2x1xf32>
    %47 = tpu.reciprocal %46 {approx = true} : vector<4x2x1xf32> -> vector<4x2x1xf32>
    %48 = vector.broadcast %47 : vector<4x2x1xf32> to vector<4x2x2xf32>
    %49 = arith.mulf %44, %48 : vector<4x2x2xf32>
    %50 = arith.truncf %49 : vector<4x2x2xf32> to vector<4x2x2xbf16>
    %51 = arith.truncf %34 : vector<4x2x64xf32> to vector<4x2x64xbf16>
    "tpu.trace_start"() <{level = 10 : i32, message = "gqk,gkd->gqd"}> : () -> ()
    %cst_20 = arith.constant dense<0.000000e+00> : vector<4x2x64xf32>
    %52 = tpu.matmul %50, %51, %cst_20 {dimension_numbers = #tpu.dot_dimension_numbers<[2], [1], [1], [2], [0, 0, 0, 1, 1, 2], [0], [0]>} : vector<4x2x2xbf16>, vector<4x2x64xbf16>, vector<4x2x64xf32> -> vector<4x2x64xf32>
    "tpu.trace_stop"() : () -> ()
    %53 = tpu.transpose %52, [1, 0, 2] : vector<4x2x64xf32> -> vector<2x4x64xf32>
    %54 = vector.shape_cast %53 : vector<2x4x64xf32> to vector<8x64xf32>
    %55 = arith.truncf %54 : vector<8x64xf32> to vector<8x64xbf16>
    %56 = vector.extract_strided_slice %28 {offsets = [0, 0], sizes = [64, 256], strides = [1, 1]} : vector<192x256xbf16> to vector<64x256xbf16>
    %cst_21 = arith.constant dense<0.000000e+00> : vector<8x256xf32>
    %57 = tpu.matmul %55, %56, %cst_21 {dimension_numbers = #tpu.dot_dimension_numbers<[1], [0], [0], [1], [0, 0, 1, 1], [], []>} : vector<8x64xbf16>, vector<64x256xbf16>, vector<8x256xf32> -> vector<8x256xf32>
    %58 = arith.addf %31, %57 : vector<8x256xf32>
    %59 = vector.extract_strided_slice %27 {offsets = [0, 0, 64], sizes = [4, 2, 64], strides = [1, 1, 1]} : vector<4x2x576xf32> to vector<4x2x64xf32>
    %60 = vector.extract_strided_slice %27 {offsets = [0, 0, 256], sizes = [4, 2, 64], strides = [1, 1, 1]} : vector<4x2x576xf32> to vector<4x2x64xf32>
    %61 = vector.extract_strided_slice %27 {offsets = [0, 0, 448], sizes = [4, 2, 64], strides = [1, 1, 1]} : vector<4x2x576xf32> to vector<4x2x64xf32>
    %62 = arith.truncf %59 : vector<4x2x64xf32> to vector<4x2x64xbf16>
    %63 = arith.truncf %60 : vector<4x2x64xf32> to vector<4x2x64xbf16>
    "tpu.trace_start"() <{level = 10 : i32, message = "gqd,gkd->gqk"}> : () -> ()
    %cst_22 = arith.constant dense<0.000000e+00> : vector<4x2x2xf32>
    %64 = tpu.matmul %62, %63, %cst_22 {dimension_numbers = #tpu.dot_dimension_numbers<[2], [2], [1], [1], [0, 0, 0, 1, 1, 1], [0], [0]>} : vector<4x2x64xbf16>, vector<4x2x64xbf16>, vector<4x2x2xf32> -> vector<4x2x2xf32>
    "tpu.trace_stop"() : () -> ()
    %cst_23 = arith.constant 1.250000e-01 : f32
    %65 = vector.broadcast %cst_23 : f32 to vector<4x2x2xf32>
    %66 = arith.mulf %64, %65 : vector<4x2x2xf32>
    %cst_24 = arith.constant dense<0xFF800000> : vector<4x2xf32>
    %67 = vector.multi_reduction <maximumf>, %66, %cst_24 [2] : vector<4x2x2xf32> to vector<4x2xf32>
    %68 = vector.shape_cast %67 : vector<4x2xf32> to vector<4x2x1xf32>
    %69 = vector.broadcast %68 : vector<4x2x1xf32> to vector<4x2x2xf32>
    %70 = arith.subf %66, %69 : vector<4x2x2xf32>
    %71 = math.exp %70 : vector<4x2x2xf32>
    %cst_25 = arith.constant dense<0.000000e+00> : vector<4x2xf32>
    %72 = vector.multi_reduction <add>, %71, %cst_25 [2] : vector<4x2x2xf32> to vector<4x2xf32>
    %73 = vector.shape_cast %72 : vector<4x2xf32> to vector<4x2x1xf32>
    %74 = tpu.reciprocal %73 {approx = true} : vector<4x2x1xf32> -> vector<4x2x1xf32>
    %75 = vector.broadcast %74 : vector<4x2x1xf32> to vector<4x2x2xf32>
    %76 = arith.mulf %71, %75 : vector<4x2x2xf32>
    %77 = arith.truncf %76 : vector<4x2x2xf32> to vector<4x2x2xbf16>
    %78 = arith.truncf %61 : vector<4x2x64xf32> to vector<4x2x64xbf16>
    "tpu.trace_start"() <{level = 10 : i32, message = "gqk,gkd->gqd"}> : () -> ()
    %cst_26 = arith.constant dense<0.000000e+00> : vector<4x2x64xf32>
    %79 = tpu.matmul %77, %78, %cst_26 {dimension_numbers = #tpu.dot_dimension_numbers<[2], [1], [1], [2], [0, 0, 0, 1, 1, 2], [0], [0]>} : vector<4x2x2xbf16>, vector<4x2x64xbf16>, vector<4x2x64xf32> -> vector<4x2x64xf32>
    "tpu.trace_stop"() : () -> ()
    %80 = tpu.transpose %79, [1, 0, 2] : vector<4x2x64xf32> -> vector<2x4x64xf32>
    %81 = vector.shape_cast %80 : vector<2x4x64xf32> to vector<8x64xf32>
    %82 = arith.truncf %81 : vector<8x64xf32> to vector<8x64xbf16>
    %83 = vector.extract_strided_slice %28 {offsets = [64, 0], sizes = [64, 256], strides = [1, 1]} : vector<192x256xbf16> to vector<64x256xbf16>
    %cst_27 = arith.constant dense<0.000000e+00> : vector<8x256xf32>
    %84 = tpu.matmul %82, %83, %cst_27 {dimension_numbers = #tpu.dot_dimension_numbers<[1], [0], [0], [1], [0, 0, 1, 1], [], []>} : vector<8x64xbf16>, vector<64x256xbf16>, vector<8x256xf32> -> vector<8x256xf32>
    %85 = arith.addf %58, %84 : vector<8x256xf32>
    %86 = vector.extract_strided_slice %27 {offsets = [0, 0, 128], sizes = [4, 2, 64], strides = [1, 1, 1]} : vector<4x2x576xf32> to vector<4x2x64xf32>
    %87 = vector.extract_strided_slice %27 {offsets = [0, 0, 320], sizes = [4, 2, 64], strides = [1, 1, 1]} : vector<4x2x576xf32> to vector<4x2x64xf32>
    %88 = vector.extract_strided_slice %27 {offsets = [0, 0, 512], sizes = [4, 2, 64], strides = [1, 1, 1]} : vector<4x2x576xf32> to vector<4x2x64xf32>
    %89 = arith.truncf %86 : vector<4x2x64xf32> to vector<4x2x64xbf16>
    %90 = arith.truncf %87 : vector<4x2x64xf32> to vector<4x2x64xbf16>
    "tpu.trace_start"() <{level = 10 : i32, message = "gqd,gkd->gqk"}> : () -> ()
    %cst_28 = arith.constant dense<0.000000e+00> : vector<4x2x2xf32>
    %91 = tpu.matmul %89, %90, %cst_28 {dimension_numbers = #tpu.dot_dimension_numbers<[2], [2], [1], [1], [0, 0, 0, 1, 1, 1], [0], [0]>} : vector<4x2x64xbf16>, vector<4x2x64xbf16>, vector<4x2x2xf32> -> vector<4x2x2xf32>
    "tpu.trace_stop"() : () -> ()
    %cst_29 = arith.constant 1.250000e-01 : f32
    %92 = vector.broadcast %cst_29 : f32 to vector<4x2x2xf32>
    %93 = arith.mulf %91, %92 : vector<4x2x2xf32>
    %cst_30 = arith.constant dense<0xFF800000> : vector<4x2xf32>
    %94 = vector.multi_reduction <maximumf>, %93, %cst_30 [2] : vector<4x2x2xf32> to vector<4x2xf32>
    %95 = vector.shape_cast %94 : vector<4x2xf32> to vector<4x2x1xf32>
    %96 = vector.broadcast %95 : vector<4x2x1xf32> to vector<4x2x2xf32>
    %97 = arith.subf %93, %96 : vector<4x2x2xf32>
    %98 = math.exp %97 : vector<4x2x2xf32>
    %cst_31 = arith.constant dense<0.000000e+00> : vector<4x2xf32>
    %99 = vector.multi_reduction <add>, %98, %cst_31 [2] : vector<4x2x2xf32> to vector<4x2xf32>
    %100 = vector.shape_cast %99 : vector<4x2xf32> to vector<4x2x1xf32>
    %101 = tpu.reciprocal %100 {approx = true} : vector<4x2x1xf32> -> vector<4x2x1xf32>
    %102 = vector.broadcast %101 : vector<4x2x1xf32> to vector<4x2x2xf32>
    %103 = arith.mulf %98, %102 : vector<4x2x2xf32>
    %104 = arith.truncf %103 : vector<4x2x2xf32> to vector<4x2x2xbf16>
    %105 = arith.truncf %88 : vector<4x2x64xf32> to vector<4x2x64xbf16>
    "tpu.trace_start"() <{level = 10 : i32, message = "gqk,gkd->gqd"}> : () -> ()
    %cst_32 = arith.constant dense<0.000000e+00> : vector<4x2x64xf32>
    %106 = tpu.matmul %104, %105, %cst_32 {dimension_numbers = #tpu.dot_dimension_numbers<[2], [1], [1], [2], [0, 0, 0, 1, 1, 2], [0], [0]>} : vector<4x2x2xbf16>, vector<4x2x64xbf16>, vector<4x2x64xf32> -> vector<4x2x64xf32>
    "tpu.trace_stop"() : () -> ()
    %107 = tpu.transpose %106, [1, 0, 2] : vector<4x2x64xf32> -> vector<2x4x64xf32>
    %108 = vector.shape_cast %107 : vector<2x4x64xf32> to vector<8x64xf32>
    %109 = arith.truncf %108 : vector<8x64xf32> to vector<8x64xbf16>
    %110 = vector.extract_strided_slice %28 {offsets = [128, 0], sizes = [64, 256], strides = [1, 1]} : vector<192x256xbf16> to vector<64x256xbf16>
    %cst_33 = arith.constant dense<0.000000e+00> : vector<8x256xf32>
    %111 = tpu.matmul %109, %110, %cst_33 {dimension_numbers = #tpu.dot_dimension_numbers<[1], [0], [0], [1], [0, 0, 1, 1], [], []>} : vector<8x64xbf16>, vector<64x256xbf16>, vector<8x256xf32> -> vector<8x256xf32>
    %112 = arith.addf %85, %111 : vector<8x256xf32>
    %c0_34 = arith.constant 0 : index
    %c0_35 = arith.constant 0 : index
    %113 = vector.load %arg7[%c0_34, %c0_35] : memref<8x256xf32, #tpu.memory_space<vmem>>, vector<8x256xf32>
    tpu.vector_store %arg7[%c0_34, %c0_35], %112 {strides = array<i32>} : memref<8x256xf32, #tpu.memory_space<vmem>>, vector<8x256xf32>,
    return
  }
  func.func @transform_0(%arg0: i32) -> (i32, i32) {
    %c0_i32 = arith.constant 0 : i32
    %c0_i32_0 = arith.constant 0 : i32
    %c0_i32_1 = arith.constant 0 : i32
    return %c0_i32, %c0_i32_0 : i32, i32
  }
  func.func @transform_1(%arg0: i32) -> (i32, i32) {
    %c0_i32 = arith.constant 0 : i32
    %c0_i32_0 = arith.constant 0 : i32
    %c0_i32_1 = arith.constant 0 : i32
    return %c0_i32, %c0_i32_0 : i32, i32
  }
  func.func @transform_2(%arg0: i32) -> (i32, i32) {
    %c0_i32 = arith.constant 0 : i32
    %c0_i32_0 = arith.constant 0 : i32
    %c0_i32_1 = arith.constant 0 : i32
    return %c0_i32, %c0_i32_0 : i32, i32
  }
  func.func @transform_3(%arg0: i32) -> (i32, i32) {
    %c0_i32 = arith.constant 0 : i32
    %c0_i32_0 = arith.constant 0 : i32
    %c0_i32_1 = arith.constant 0 : i32
    return %c0_i32, %c0_i32_0 : i32, i32
  }
  func.func @transform_4(%arg0: i32) -> (i32, i32) {
    %c0_i32 = arith.constant 0 : i32
    %c0_i32_0 = arith.constant 0 : i32
    %c0_i32_1 = arith.constant 0 : i32
    return %c0_i32, %c0_i32_0 : i32, i32
  }
  func.func @transform_5(%arg0: i32) -> (i32, i32) {
    %c0_i32 = arith.constant 0 : i32
    %c0_i32_0 = arith.constant 0 : i32
    %c0_i32_1 = arith.constant 0 : i32
    return %c0_i32, %c0_i32_0 : i32, i32
  }
  func.func @transform_6(%arg0: i32) -> (i32, i32) {
    %c0_i32 = arith.constant 0 : i32
    %c0_i32_0 = arith.constant 0 : i32
    %c0_i32_1 = arith.constant 0 : i32
    return %c0_i32, %c0_i32_0 : i32, i32
  }
}

</mosaic_0001>

<llo_original>
// kernel: shuffle_attention_2d.1
$region0: #{shuffle_attention_2d.1}
  #allocation0 [shape = 'u32[]', space=smem, size = 0x4, offset = 0x4, fixed_abs, tag = 'smem constant byte address 0x4 - core index']
  #allocation1 [shape = 'u32[72,128]{1,0:T(1,128)}', space=vmem, size = 0x9000, scoped, tag = 'internal scratch']
  %s0 = inlined_call_operand.vmem [shape: f32[8,256], index: 0, kind: input, shape index: {}]
  %s1 = inlined_call_operand.vmem [shape: f32[1,256], index: 1, kind: input, shape index: {}]
  %s2 = inlined_call_operand.vmem [shape: f32[1,256], index: 2, kind: input, shape index: {}]
  %s3 = inlined_call_operand.vmem [shape: bf16[256,576], index: 3, kind: input, shape index: {}]
  %s4 = inlined_call_operand.vmem [shape: bf16[192,256], index: 4, kind: input, shape index: {}]
  %s5 = inlined_call_operand.vmem [shape: f32[1,256], index: 5, kind: input, shape index: {}]
  %s6 = inlined_call_operand.vmem [shape: f32[8,256], index: 6, kind: output, shape index: {}]
  %s7 = sld [smem:[#allocation0]]
  $region34: #{shuffle_attention_2d.1} parent=0
    _
  %s9 = ssub.s32 1, %s7
  %s10 = scalar_select 0, %s9, %s7
  // Predicated region
  $region2: #{shuffle_attention_2d.1} parent=0 // pred_check
    _
  $region3: #{shuffle_attention_2d.1} parent=0 // pred_check_branch
    %12 = sbr.rel (0) target = $region5
  $region4: #{shuffle_attention_2d.1} parent=0 // pred_region
    _
  $region5: #{shuffle_attention_2d.1} parent=0 // pred_fallthru
    _
  // Predicated region
  $region6: #{shuffle_attention_2d.1} parent=0 // pred_check
    _
  $region7: #{shuffle_attention_2d.1} parent=0 // pred_check_branch
    %14 = sbr.rel (0) target = $region9
  $region8: #{shuffle_attention_2d.1} parent=0 // pred_region
    _
  $region9: #{shuffle_attention_2d.1} parent=0 // pred_fallthru
    _
  // Predicated region
  $region10: #{shuffle_attention_2d.1} parent=0 // pred_check
    _
  $region11: #{shuffle_attention_2d.1} parent=0 // pred_check_branch
    %16 = sbr.rel (0) target = $region13
  $region12: #{shuffle_attention_2d.1} parent=0 // pred_region
    _
  $region13: #{shuffle_attention_2d.1} parent=0 // pred_fallthru
    _
  // Predicated region
  $region14: #{shuffle_attention_2d.1} parent=0 // pred_check
    _
  $region15: #{shuffle_attention_2d.1} parent=0 // pred_check_branch
    %18 = sbr.rel (0) target = $region17
  $region16: #{shuffle_attention_2d.1} parent=0 // pred_region
    _
  $region17: #{shuffle_attention_2d.1} parent=0 // pred_fallthru
    _
  // Predicated region
  $region18: #{shuffle_attention_2d.1} parent=0 // pred_check
    _
  $region19: #{shuffle_attention_2d.1} parent=0 // pred_check_branch
    %20 = sbr.rel (0) target = $region21
  $region20: #{shuffle_attention_2d.1} parent=0 // pred_region
    _
  $region21: #{shuffle_attention_2d.1} parent=0 // pred_fallthru
    _
  // Predicated region
  $region22: #{shuffle_attention_2d.1} parent=0 // pred_check
    _
  $region23: #{shuffle_attention_2d.1} parent=0 // pred_check_branch
    %22 = sbr.rel (0) target = $region25
  $region24: #{shuffle_attention_2d.1} parent=0 // pred_region
    _
  $region25: #{shuffle_attention_2d.1} parent=0 // pred_fallthru
    _
  %v24 = vld [vmem:[%s0] sm:$0xff]
  %v25 = vld [vmem:[%s0 + $0x8] sm:$0xff]
  %v26 = vadd.f32 %v24, %v25
  %27 = vadd.xlane.f32.xlu0 %v26
  %v28 = vpop.xlane.xlu0 %27
  %v29 = vrcp.pop 256.0
  %v30 = vmul.f32 256.0, %v29
  %v31 = vsub.f32 1.0, %v30
  %v32 = vmul.f32 %v29, %v31
  %v33 = vadd.f32 %v29, %v32
  %vm34 = vweird.f32 %v29
  %v35 = vsel %vm34, %v29, %v33
  %v36 = vmul.f32 %v28, %v35
  %v37 = vsub.f32 %v24, %v36
  %v38 = vsub.f32 %v25, %v36
  %v39 = vmul.f32 %v37, %v37
  %v40 = vmul.f32 %v38, %v38
  %v41 = vadd.f32 %v39, %v40
  %42 = vadd.xlane.f32.xlu0 %v41
  %v43 = vpop.xlane.xlu0 %42
  %v44 = vmul.f32 %v43, %v35
  %v45 = vadd.f32 %v44, 1e-05
  %v46 = vrsqrt.pop %v45
  %v47 = vmul.f32 %v46, %v45
  %v48 = vmul.f32 %v47, %v46
  %v49 = vmul.f32 0.5, %v48
  %v50 = vsub.f32 1.5, %v49
  %v51 = vmul.f32 %v46, %v50
  %vm52 = vweird.f32 %v45
  %vm53 = vweird.f32 %v46
  %vm54 = vmor %vm52, %vm53
  %v55 = vsel %vm54, %v46, %v51
  %v56 = vmul.f32 %v37, %v55
  %v57 = vmul.f32 %v38, %v55
  %v58 = vld [vmem:[%s1] sm:$0x3]
  %v60 = vperm.slane %v58, 0
  %v61 = vperm.slane %v58, 1
  %v64 = vmul.f32 %v56, %v60
  %v65 = vmul.f32 %v57, %v61
  %v66 = vld [vmem:[%s2] sm:$0x3]
  %v68 = vperm.slane %v66, 0
  %v69 = vperm.slane %v66, 1
  %v72 = vadd.f32 %v64, %v68
  %v73 = vadd.f32 %v65, %v69
  %v74 = vpack.c.bf16 %v72, %v72
  %v75 = vpack.c.bf16 %v73, %v73
  %v76 = vld [vmem:[%s3] sm:$0xff]
  %v77 = vld [vmem:[%s3 + $0x8] sm:$0xff]
  %v78 = vld [vmem:[%s3 + $0x10] sm:$0xf]
  %v79 = vld [vmem:[%s3 + $0x14] sm:$0xff]
  %v80 = vld [vmem:[%s3 + $0x1c] sm:$0xff]
  %v81 = vld [vmem:[%s3 + $0x24] sm:$0xf]
  %v82 = vld [vmem:[%s3 + $0x28] sm:$0xff]
  %v83 = vld [vmem:[%s3 + $0x30] sm:$0xff]
  %v84 = vld [vmem:[%s3 + $0x38] sm:$0xf]
  %v85 = vld [vmem:[%s3 + $0x3c] sm:$0xff]
  %v86 = vld [vmem:[%s3 + $0x44] sm:$0xff]
  %v87 = vld [vmem:[%s3 + $0x4c] sm:$0xf]
  %v88 = vld [vmem:[%s3 + $0x50] sm:$0xff]
  %v89 = vld [vmem:[%s3 + $0x58] sm:$0xff]
  %v90 = vld [vmem:[%s3 + $0x60] sm:$0xf]
  %v91 = vld [vmem:[%s3 + $0x64] sm:$0xff]
  %v92 = vld [vmem:[%s3 + $0x6c] sm:$0xff]
  %v93 = vld [vmem:[%s3 + $0x74] sm:$0xf]
  %v94 = vld [vmem:[%s3 + $0x78] sm:$0xff]
  %v95 = vld [vmem:[%s3 + $0x80] sm:$0xff]
  %v96 = vld [vmem:[%s3 + $0x88] sm:$0xf]
  %v97 = vld [vmem:[%s3 + $0x8c] sm:$0xff]
  %v98 = vld [vmem:[%s3 + $0x94] sm:$0xff]
  %v99 = vld [vmem:[%s3 + $0x9c] sm:$0xf]
  %v100 = vld [vmem:[%s3 + $0xa0] sm:$0xff]
  %v101 = vld [vmem:[%s3 + $0xa8] sm:$0xff]
  %v102 = vld [vmem:[%s3 + $0xb0] sm:$0xf]
  %v103 = vld [vmem:[%s3 + $0xb4] sm:$0xff]
  %v104 = vld [vmem:[%s3 + $0xbc] sm:$0xff]
  %v105 = vld [vmem:[%s3 + $0xc4] sm:$0xf]
  %v106 = vld [vmem:[%s3 + $0xc8] sm:$0xff]
  %v107 = vld [vmem:[%s3 + $0xd0] sm:$0xff]
  %v108 = vld [vmem:[%s3 + $0xd8] sm:$0xf]
  %v109 = vld [vmem:[%s3 + $0xdc] sm:$0xff]
  %v110 = vld [vmem:[%s3 + $0xe4] sm:$0xff]
  %v111 = vld [vmem:[%s3 + $0xec] sm:$0xf]
  %v112 = vld [vmem:[%s3 + $0xf0] sm:$0xff]
  %v113 = vld [vmem:[%s3 + $0xf8] sm:$0xff]
  %v114 = vld [vmem:[%s3 + $0x100] sm:$0xf]
  %v115 = vld [vmem:[%s3 + $0x104] sm:$0xff]
  %v116 = vld [vmem:[%s3 + $0x10c] sm:$0xff]
  %v117 = vld [vmem:[%s3 + $0x114] sm:$0xf]
  %v118 = vld [vmem:[%s3 + $0x118] sm:$0xff]
  %v119 = vld [vmem:[%s3 + $0x120] sm:$0xff]
  %v120 = vld [vmem:[%s3 + $0x128] sm:$0xf]
  %v121 = vld [vmem:[%s3 + $0x12c] sm:$0xff]
  %v122 = vld [vmem:[%s3 + $0x134] sm:$0xff]
  %v123 = vld [vmem:[%s3 + $0x13c] sm:$0xf]
  %v124 = vld [vmem:[%s3 + $0x140] sm:$0xff]
  %v125 = vld [vmem:[%s3 + $0x148] sm:$0xff]
  %v126 = vld [vmem:[%s3 + $0x150] sm:$0xf]
  %v127 = vld [vmem:[%s3 + $0x154] sm:$0xff]
  %v128 = vld [vmem:[%s3 + $0x15c] sm:$0xff]
  %v129 = vld [vmem:[%s3 + $0x164] sm:$0xf]
  %v130 = vld [vmem:[%s3 + $0x168] sm:$0xff]
  %v131 = vld [vmem:[%s3 + $0x170] sm:$0xff]
  %v132 = vld [vmem:[%s3 + $0x178] sm:$0xf]
  %v133 = vld [vmem:[%s3 + $0x17c] sm:$0xff]
  %v134 = vld [vmem:[%s3 + $0x184] sm:$0xff]
  %v135 = vld [vmem:[%s3 + $0x18c] sm:$0xf]
  %v136 = vld [vmem:[%s3 + $0x190] sm:$0xff]
  %v137 = vld [vmem:[%s3 + $0x198] sm:$0xff]
  %v138 = vld [vmem:[%s3 + $0x1a0] sm:$0xf]
  %v139 = vld [vmem:[%s3 + $0x1a4] sm:$0xff]
  %v140 = vld [vmem:[%s3 + $0x1ac] sm:$0xff]
  %v141 = vld [vmem:[%s3 + $0x1b4] sm:$0xf]
  %v142 = vld [vmem:[%s3 + $0x1b8] sm:$0xff]
  %v143 = vld [vmem:[%s3 + $0x1c0] sm:$0xff]
  %v144 = vld [vmem:[%s3 + $0x1c8] sm:$0xf]
  %v145 = vld [vmem:[%s3 + $0x1cc] sm:$0xff]
  %v146 = vld [vmem:[%s3 + $0x1d4] sm:$0xff]
  %v147 = vld [vmem:[%s3 + $0x1dc] sm:$0xf]
  %v148 = vld [vmem:[%s3 + $0x1e0] sm:$0xff]
  %v149 = vld [vmem:[%s3 + $0x1e8] sm:$0xff]
  %v150 = vld [vmem:[%s3 + $0x1f0] sm:$0xf]
  %v151 = vld [vmem:[%s3 + $0x1f4] sm:$0xff]
  %v152 = vld [vmem:[%s3 + $0x1fc] sm:$0xff]
  %v153 = vld [vmem:[%s3 + $0x204] sm:$0xf]
  %v154 = vld [vmem:[%s3 + $0x208] sm:$0xff]
  %v155 = vld [vmem:[%s3 + $0x210] sm:$0xff]
  %v156 = vld [vmem:[%s3 + $0x218] sm:$0xf]
  %v157 = vld [vmem:[%s3 + $0x21c] sm:$0xff]
  %v158 = vld [vmem:[%s3 + $0x224] sm:$0xff]
  %v159 = vld [vmem:[%s3 + $0x22c] sm:$0xf]
  %v160 = vld [vmem:[%s3 + $0x230] sm:$0xff]
  %v161 = vld [vmem:[%s3 + $0x238] sm:$0xff]
  %v162 = vld [vmem:[%s3 + $0x240] sm:$0xf]
  %v163 = vld [vmem:[%s3 + $0x244] sm:$0xff]
  %v164 = vld [vmem:[%s3 + $0x24c] sm:$0xff]
  %v165 = vld [vmem:[%s3 + $0x254] sm:$0xf]
  %v166 = vld [vmem:[%s3 + $0x258] sm:$0xff]
  %v167 = vld [vmem:[%s3 + $0x260] sm:$0xff]
  %v168 = vld [vmem:[%s3 + $0x268] sm:$0xf]
  %v169 = vld [vmem:[%s3 + $0x26c] sm:$0xff]
  %v170 = vld [vmem:[%s3 + $0x274] sm:$0xff]
  %v171 = vld [vmem:[%s3 + $0x27c] sm:$0xf]
  %v268 = vunpack.c.l.b16 %v76
  %v269 = vunpack.c.h.b16 %v76
  %v270 = vunpack.c.l.b16 %v77
  %v271 = vunpack.c.h.b16 %v77
  %v272 = vunpack.c.l.b16 %v78
  %v273 = vunpack.c.l.b16 %v79
  %v274 = vunpack.c.h.b16 %v79
  %v275 = vunpack.c.l.b16 %v80
  %v276 = vunpack.c.h.b16 %v80
  %v277 = vunpack.c.l.b16 %v81
  %v278 = vunpack.c.l.b16 %v82
  %v279 = vunpack.c.h.b16 %v82
  %v280 = vunpack.c.l.b16 %v83
  %v281 = vunpack.c.h.b16 %v83
  %v282 = vunpack.c.l.b16 %v84
  %v283 = vunpack.c.l.b16 %v85
  %v284 = vunpack.c.h.b16 %v85
  %v285 = vunpack.c.l.b16 %v86
  %v286 = vunpack.c.h.b16 %v86
  %v287 = vunpack.c.l.b16 %v87
  %v288 = vunpack.c.l.b16 %v88
  %v289 = vunpack.c.h.b16 %v88
  %v290 = vunpack.c.l.b16 %v89
  %v291 = vunpack.c.h.b16 %v89
  %v292 = vunpack.c.l.b16 %v90
  %v293 = vunpack.c.l.b16 %v91
  %v294 = vunpack.c.h.b16 %v91
  %v295 = vunpack.c.l.b16 %v92
  %v296 = vunpack.c.h.b16 %v92
  %v297 = vunpack.c.l.b16 %v93
  %v298 = vunpack.c.l.b16 %v94
  %v299 = vunpack.c.h.b16 %v94
  %v300 = vunpack.c.l.b16 %v95
  %v301 = vunpack.c.h.b16 %v95
  %v302 = vunpack.c.l.b16 %v96
  %v303 = vunpack.c.l.b16 %v97
  %v304 = vunpack.c.h.b16 %v97
  %v305 = vunpack.c.l.b16 %v98
  %v306 = vunpack.c.h.b16 %v98
  %v307 = vunpack.c.l.b16 %v99
  %v308 = vunpack.c.l.b16 %v100
  %v309 = vunpack.c.h.b16 %v100
  %v310 = vunpack.c.l.b16 %v101
  %v311 = vunpack.c.h.b16 %v101
  %v312 = vunpack.c.l.b16 %v102
  %v313 = vunpack.c.l.b16 %v103
  %v314 = vunpack.c.h.b16 %v103
  %v315 = vunpack.c.l.b16 %v104
  %v316 = vunpack.c.h.b16 %v104
  %v317 = vunpack.c.l.b16 %v105
  %v318 = vunpack.c.l.b16 %v106
  %v319 = vunpack.c.h.b16 %v106
  %v320 = vunpack.c.l.b16 %v107
  %v321 = vunpack.c.h.b16 %v107
  %v322 = vunpack.c.l.b16 %v108
  %v323 = vunpack.c.l.b16 %v109
  %v324 = vunpack.c.h.b16 %v109
  %v325 = vunpack.c.l.b16 %v110
  %v326 = vunpack.c.h.b16 %v110
  %v327 = vunpack.c.l.b16 %v111
  %v328 = vunpack.c.l.b16 %v112
  %v329 = vunpack.c.h.b16 %v112
  %v330 = vunpack.c.l.b16 %v113
  %v331 = vunpack.c.h.b16 %v113
  %v332 = vunpack.c.l.b16 %v114
  %v333 = vunpack.c.l.b16 %v115
  %v334 = vunpack.c.h.b16 %v115
  %v335 = vunpack.c.l.b16 %v116
  %v336 = vunpack.c.h.b16 %v116
  %v337 = vunpack.c.l.b16 %v117
  %v338 = vunpack.c.l.b16 %v118
  %v339 = vunpack.c.h.b16 %v118
  %v340 = vunpack.c.l.b16 %v119
  %v341 = vunpack.c.h.b16 %v119
  %v342 = vunpack.c.l.b16 %v120
  %v343 = vunpack.c.l.b16 %v121
  %v344 = vunpack.c.h.b16 %v121
  %v345 = vunpack.c.l.b16 %v122
  %v346 = vunpack.c.h.b16 %v122
  %v347 = vunpack.c.l.b16 %v123
  %v348 = vunpack.c.l.b16 %v124
  %v349 = vunpack.c.h.b16 %v124
  %v350 = vunpack.c.l.b16 %v125
  %v351 = vunpack.c.h.b16 %v125
  %v352 = vunpack.c.l.b16 %v126
  %v353 = vunpack.c.l.b16 %v127
  %v354 = vunpack.c.h.b16 %v127
  %v355 = vunpack.c.l.b16 %v128
  %v356 = vunpack.c.h.b16 %v128
  %v357 = vunpack.c.l.b16 %v129
  %v358 = vunpack.c.l.b16 %v130
  %v359 = vunpack.c.h.b16 %v130
  %v360 = vunpack.c.l.b16 %v131
  %v361 = vunpack.c.h.b16 %v131
  %v362 = vunpack.c.l.b16 %v132
  %v363 = vunpack.c.l.b16 %v133
  %v364 = vunpack.c.h.b16 %v133
  %v365 = vunpack.c.l.b16 %v134
  %v366 = vunpack.c.h.b16 %v134
  %v367 = vunpack.c.l.b16 %v135
  %v368 = vunpack.c.l.b16 %v136
  %v369 = vunpack.c.h.b16 %v136
  %v370 = vunpack.c.l.b16 %v137
  %v371 = vunpack.c.h.b16 %v137
  %v372 = vunpack.c.l.b16 %v138
  %v373 = vunpack.c.l.b16 %v139
  %v374 = vunpack.c.h.b16 %v139
  %v375 = vunpack.c.l.b16 %v140
  %v376 = vunpack.c.h.b16 %v140
  %v377 = vunpack.c.l.b16 %v141
  %v378 = vunpack.c.l.b16 %v142
  %v379 = vunpack.c.h.b16 %v142
  %v380 = vunpack.c.l.b16 %v143
  %v381 = vunpack.c.h.b16 %v143
  %v382 = vunpack.c.l.b16 %v144
  %v383 = vunpack.c.l.b16 %v145
  %v384 = vunpack.c.h.b16 %v145
  %v385 = vunpack.c.l.b16 %v146
  %v386 = vunpack.c.h.b16 %v146
  %v387 = vunpack.c.l.b16 %v147
  %v388 = vunpack.c.l.b16 %v148
  %v389 = vunpack.c.h.b16 %v148
  %v390 = vunpack.c.l.b16 %v149
  %v391 = vunpack.c.h.b16 %v149
  %v392 = vunpack.c.l.b16 %v150
  %v393 = vunpack.c.l.b16 %v151
  %v394 = vunpack.c.h.b16 %v151
  %v395 = vunpack.c.l.b16 %v152
  %v396 = vunpack.c.h.b16 %v152
  %v397 = vunpack.c.l.b16 %v153
  %v398 = vunpack.c.l.b16 %v154
  %v399 = vunpack.c.h.b16 %v154
  %v400 = vunpack.c.l.b16 %v155
  %v401 = vunpack.c.h.b16 %v155
  %v402 = vunpack.c.l.b16 %v156
  %v403 = vunpack.c.l.b16 %v157
  %v404 = vunpack.c.h.b16 %v157
  %v405 = vunpack.c.l.b16 %v158
  %v406 = vunpack.c.h.b16 %v158
  %v407 = vunpack.c.l.b16 %v159
  %v408 = vunpack.c.l.b16 %v160
  %v409 = vunpack.c.h.b16 %v160
  %v410 = vunpack.c.l.b16 %v161
  %v411 = vunpack.c.h.b16 %v161
  %v412 = vunpack.c.l.b16 %v162
  %v413 = vunpack.c.l.b16 %v163
  %v414 = vunpack.c.h.b16 %v163
  %v415 = vunpack.c.l.b16 %v164
  %v416 = vunpack.c.h.b16 %v164
  %v417 = vunpack.c.l.b16 %v165
  %v418 = vunpack.c.l.b16 %v166
  %v419 = vunpack.c.h.b16 %v166
  %v420 = vunpack.c.l.b16 %v167
  %v421 = vunpack.c.h.b16 %v167
  %v422 = vunpack.c.l.b16 %v168
  %v423 = vunpack.c.l.b16 %v169
  %v424 = vunpack.c.h.b16 %v169
  %v425 = vunpack.c.l.b16 %v170
  %v426 = vunpack.c.h.b16 %v170
  %v427 = vunpack.c.l.b16 %v171
  %v428 = vpack.c.b16 %v273, %v268
  %v429 = vpack.c.b16 %v274, %v269
  %v430 = vpack.c.b16 %v275, %v270
  %v431 = vpack.c.b16 %v276, %v271
  %v432 = vpack.c.b16 %v277, %v272
  %v433 = vpack.c.b16 %v283, %v278
  %v434 = vpack.c.b16 %v284, %v279
  %v435 = vpack.c.b16 %v285, %v280
  %v436 = vpack.c.b16 %v286, %v281
  %v437 = vpack.c.b16 %v287, %v282
  %v438 = vpack.c.b16 %v293, %v288
  %v439 = vpack.c.b16 %v294, %v289
  %v440 = vpack.c.b16 %v295, %v290
  %v441 = vpack.c.b16 %v296, %v291
  %v442 = vpack.c.b16 %v297, %v292
  %v443 = vpack.c.b16 %v303, %v298
  %v444 = vpack.c.b16 %v304, %v299
  %v445 = vpack.c.b16 %v305, %v300
  %v446 = vpack.c.b16 %v306, %v301
  %v447 = vpack.c.b16 %v307, %v302
  %v448 = vpack.c.b16 %v313, %v308
  %v449 = vpack.c.b16 %v314, %v309
  %v450 = vpack.c.b16 %v315, %v310
  %v451 = vpack.c.b16 %v316, %v311
  %v452 = vpack.c.b16 %v317, %v312
  %v453 = vpack.c.b16 %v323, %v318
  %v454 = vpack.c.b16 %v324, %v319
  %v455 = vpack.c.b16 %v325, %v320
  %v456 = vpack.c.b16 %v326, %v321
  %v457 = vpack.c.b16 %v327, %v322
  %v458 = vpack.c.b16 %v333, %v328
  %v459 = vpack.c.b16 %v334, %v329
  %v460 = vpack.c.b16 %v335, %v330
  %v461 = vpack.c.b16 %v336, %v331
  %v462 = vpack.c.b16 %v337, %v332
  %v463 = vpack.c.b16 %v343, %v338
  %v464 = vpack.c.b16 %v344, %v339
  %v465 = vpack.c.b16 %v345, %v340
  %v466 = vpack.c.b16 %v346, %v341
  %v467 = vpack.c.b16 %v347, %v342
  %v468 = vpack.c.b16 %v353, %v348
  %v469 = vpack.c.b16 %v354, %v349
  %v470 = vpack.c.b16 %v355, %v350
  %v471 = vpack.c.b16 %v356, %v351
  %v472 = vpack.c.b16 %v357, %v352
  %v473 = vpack.c.b16 %v363, %v358
  %v474 = vpack.c.b16 %v364, %v359
  %v475 = vpack.c.b16 %v365, %v360
  %v476 = vpack.c.b16 %v366, %v361
  %v477 = vpack.c.b16 %v367, %v362
  %v478 = vpack.c.b16 %v373, %v368
  %v479 = vpack.c.b16 %v374, %v369
  %v480 = vpack.c.b16 %v375, %v370
  %v481 = vpack.c.b16 %v376, %v371
  %v482 = vpack.c.b16 %v377, %v372
  %v483 = vpack.c.b16 %v383, %v378
  %v484 = vpack.c.b16 %v384, %v379
  %v485 = vpack.c.b16 %v385, %v380
  %v486 = vpack.c.b16 %v386, %v381
  %v487 = vpack.c.b16 %v387, %v382
  %v488 = vpack.c.b16 %v393, %v388
  %v489 = vpack.c.b16 %v394, %v389
  %v490 = vpack.c.b16 %v395, %v390
  %v491 = vpack.c.b16 %v396, %v391
  %v492 = vpack.c.b16 %v397, %v392
  %v493 = vpack.c.b16 %v403, %v398
  %v494 = vpack.c.b16 %v404, %v399
  %v495 = vpack.c.b16 %v405, %v400
  %v496 = vpack.c.b16 %v406, %v401
  %v497 = vpack.c.b16 %v407, %v402
  %v498 = vpack.c.b16 %v413, %v408
  %v499 = vpack.c.b16 %v414, %v409
  %v500 = vpack.c.b16 %v415, %v410
  %v501 = vpack.c.b16 %v416, %v411
  %v502 = vpack.c.b16 %v417, %v412
  %v503 = vpack.c.b16 %v423, %v418
  %v504 = vpack.c.b16 %v424, %v419
  %v505 = vpack.c.b16 %v425, %v420
  %v506 = vpack.c.b16 %v426, %v421
  %v507 = vpack.c.b16 %v427, %v422
  %588 = vmatpush.bf16.msra.mxu0 %v463
  %589 = vmatpush.bf16.msra.mxu0 %v458
  %590 = vmatpush.bf16.msra.mxu0 %v453
  %591 = vmatpush.bf16.msra.mxu0 %v448
  %592 = vmatpush.bf16.msra.mxu0 %v443
  %593 = vmatpush.bf16.msra.mxu0 %v438
  %594 = vmatpush.bf16.msra.mxu0 %v433
  %595 = vmatpush.bf16.msra.mxu0 %v428
  %596 = vmatmul.bf16.gmra.mxu0 %v74
  %v597 = vpop.f32.mrf.mxu0
  %v598 = vadd.f32 0.0, %v597
  %v599 = vpop.f32.mrf.mxu0
  %600 = vdwg.mxu0
  %601 = vmatpush.bf16.msra.mxu0 %v503
  %602 = vmatpush.bf16.msra.mxu0 %v498
  %603 = vmatpush.bf16.msra.mxu0 %v493
  %604 = vmatpush.bf16.msra.mxu0 %v488
  %605 = vmatpush.bf16.msra.mxu0 %v483
  %606 = vmatpush.bf16.msra.mxu0 %v478
  %607 = vmatpush.bf16.msra.mxu0 %v473
  %608 = vmatpush.bf16.msra.mxu0 %v468
  %609 = vmatmul.bf16.gmra.mxu0 %v75
  %v610 = vpop.f32.mrf.mxu0
  %v611 = vadd.f32 %v598, %v610
  %v612 = vpop.f32.mrf.mxu0
  %613 = vdwg.mxu0
  %614 = vmatpush.bf16.msra.mxu0 %v464
  %615 = vmatpush.bf16.msra.mxu0 %v459
  %616 = vmatpush.bf16.msra.mxu0 %v454
  %617 = vmatpush.bf16.msra.mxu0 %v449
  %618 = vmatpush.bf16.msra.mxu0 %v444
  %619 = vmatpush.bf16.msra.mxu0 %v439
  %620 = vmatpush.bf16.msra.mxu0 %v434
  %621 = vmatpush.bf16.msra.mxu0 %v429
  %622 = vmatmul.bf16.gmra.mxu0 %v74
  %v623 = vpop.f32.mrf.mxu0
  %v624 = vadd.f32 0.0, %v623
  %v625 = vpop.f32.mrf.mxu0
  %626 = vdwg.mxu0
  %627 = vmatpush.bf16.msra.mxu0 %v504
  %628 = vmatpush.bf16.msra.mxu0 %v499
  %629 = vmatpush.bf16.msra.mxu0 %v494
  %630 = vmatpush.bf16.msra.mxu0 %v489
  %631 = vmatpush.bf16.msra.mxu0 %v484
  %632 = vmatpush.bf16.msra.mxu0 %v479
  %633 = vmatpush.bf16.msra.mxu0 %v474
  %634 = vmatpush.bf16.msra.mxu0 %v469
  %635 = vmatmul.bf16.gmra.mxu0 %v75
  %v636 = vpop.f32.mrf.mxu0
  %v637 = vadd.f32 %v624, %v636
  %v638 = vpop.f32.mrf.mxu0
  %639 = vdwg.mxu0
  %640 = vmatpush.bf16.msra.mxu0 %v465
  %641 = vmatpush.bf16.msra.mxu0 %v460
  %642 = vmatpush.bf16.msra.mxu0 %v455
  %643 = vmatpush.bf16.msra.mxu0 %v450
  %644 = vmatpush.bf16.msra.mxu0 %v445
  %645 = vmatpush.bf16.msra.mxu0 %v440
  %646 = vmatpush.bf16.msra.mxu0 %v435
  %647 = vmatpush.bf16.msra.mxu0 %v430
  %648 = vmatmul.bf16.gmra.mxu0 %v74
  %v649 = vpop.f32.mrf.mxu0
  %v650 = vadd.f32 0.0, %v649
  %v651 = vpop.f32.mrf.mxu0
  %652 = vdwg.mxu0
  %653 = vmatpush.bf16.msra.mxu0 %v505
  %654 = vmatpush.bf16.msra.mxu0 %v500
  %655 = vmatpush.bf16.msra.mxu0 %v495
  %656 = vmatpush.bf16.msra.mxu0 %v490
  %657 = vmatpush.bf16.msra.mxu0 %v485
  %658 = vmatpush.bf16.msra.mxu0 %v480
  %659 = vmatpush.bf16.msra.mxu0 %v475
  %660 = vmatpush.bf16.msra.mxu0 %v470
  %661 = vmatmul.bf16.gmra.mxu0 %v75
  %v662 = vpop.f32.mrf.mxu0
  %v663 = vadd.f32 %v650, %v662
  %v664 = vpop.f32.mrf.mxu0
  %665 = vdwg.mxu0
  %666 = vmatpush.bf16.msra.mxu0 %v466
  %667 = vmatpush.bf16.msra.mxu0 %v461
  %668 = vmatpush.bf16.msra.mxu0 %v456
  %669 = vmatpush.bf16.msra.mxu0 %v451
  %670 = vmatpush.bf16.msra.mxu0 %v446
  %671 = vmatpush.bf16.msra.mxu0 %v441
  %672 = vmatpush.bf16.msra.mxu0 %v436
  %673 = vmatpush.bf16.msra.mxu0 %v431
  %674 = vmatmul.bf16.gmra.mxu0 %v74
  %v675 = vpop.f32.mrf.mxu0
  %v676 = vadd.f32 0.0, %v675
  %v677 = vpop.f32.mrf.mxu0
  %678 = vdwg.mxu0
  %679 = vmatpush.bf16.msra.mxu0 %v506
  %680 = vmatpush.bf16.msra.mxu0 %v501
  %681 = vmatpush.bf16.msra.mxu0 %v496
  %682 = vmatpush.bf16.msra.mxu0 %v491
  %683 = vmatpush.bf16.msra.mxu0 %v486
  %684 = vmatpush.bf16.msra.mxu0 %v481
  %685 = vmatpush.bf16.msra.mxu0 %v476
  %686 = vmatpush.bf16.msra.mxu0 %v471
  %687 = vmatmul.bf16.gmra.mxu0 %v75
  %v688 = vpop.f32.mrf.mxu0
  %v689 = vadd.f32 %v676, %v688
  %v690 = vpop.f32.mrf.mxu0
  %691 = vdwg.mxu0
  %692 = vmatpush.bf16.msra.mxu0 %v467
  %693 = vmatpush.bf16.msra.mxu0 %v462
  %694 = vmatpush.bf16.msra.mxu0 %v457
  %695 = vmatpush.bf16.msra.mxu0 %v452
  %696 = vmatpush.bf16.msra.mxu0 %v447
  %697 = vmatpush.bf16.msra.mxu0 %v442
  %698 = vmatpush.bf16.msra.mxu0 %v437
  %699 = vmatpush.bf16.msra.mxu0 %v432
  %700 = vmatmul.bf16.gmra.mxu0 %v74
  %v701 = vpop.f32.mrf.mxu0
  %v702 = vadd.f32 0.0, %v701
  %v703 = vpop.f32.mrf.mxu0
  %704 = vdwg.mxu0
  %705 = vmatpush.bf16.msra.mxu0 %v507
  %706 = vmatpush.bf16.msra.mxu0 %v502
  %707 = vmatpush.bf16.msra.mxu0 %v497
  %708 = vmatpush.bf16.msra.mxu0 %v492
  %709 = vmatpush.bf16.msra.mxu0 %v487
  %710 = vmatpush.bf16.msra.mxu0 %v482
  %711 = vmatpush.bf16.msra.mxu0 %v477
  %712 = vmatpush.bf16.msra.mxu0 %v472
  %713 = vmatmul.bf16.gmra.mxu0 %v75
  %v714 = vpop.f32.mrf.mxu0
  %v715 = vadd.f32 %v702, %v714
  %v716 = vpop.f32.mrf.mxu0
  %717 = vdwg.mxu0
  %v723 = vrot.slane %v637, 4
  %v724 = vrot.slane %v689, 4
  %vm725 = vcmask 1043456
  %v726 = vsel %vm725, %v611, %v723
  %v727 = vsel %vm725, %v663, %v724
  %v728 = vsel %vm725, %v723, %v611
  %v729 = vrot.slane %v728, 4
  %v730 = vsel %vm725, %v724, %v663
  %v731 = vrot.slane %v730, 4
  %v732 = vrot.slane %v715, 4
  %v737 = vrot.slane %v726, 4
  %vm738 = vcmask 1047556
  %v739 = vsel %vm738, 0.0, %v737
  %v741 = vunpack.c.l.s4 1983009808
  %v742 = vunpack.c.0.s8 %v741
  %v743 = vperm.slane %v726, %v742
  %v745 = vunpack.c.l.s4 1983009808
  %v746 = vunpack.c.0.s8 %v745
  %v747 = vperm.slane %v739, %v746
  %v748 = vrot.slane %v729, 4
  %v749 = vsel %vm738, 0.0, %v748
  %v751 = vunpack.c.l.s4 1983009808
  %v752 = vunpack.c.0.s8 %v751
  %v753 = vperm.slane %v729, %v752
  %v755 = vunpack.c.l.s4 1983009808
  %v756 = vunpack.c.0.s8 %v755
  %v757 = vperm.slane %v749, %v756
  %v758 = vrot.slane %v753, 4
  %v759 = vsel %vm738, %v758, %v743
  %v760 = vrot.slane %v743, 4
  %v761 = vsel %vm738, %v753, %v760
  %v763 = vunpack.c.l.s4 1934713408
  %v764 = vunpack.c.0.s8 %v763
  %v765 = vperm.slane %v759, %v764
  %v767 = vunpack.c.l.s4 1934713408
  %v768 = vunpack.c.0.s8 %v767
  %v769 = vperm.slane %v761, %v768
  %v770 = vrot.slane %v757, 4
  %v771 = vsel %vm738, %v770, %v747
  %v772 = vrot.slane %v747, 4
  %v773 = vsel %vm738, %v757, %v772
  %v775 = vunpack.c.l.s4 1934713408
  %v776 = vunpack.c.0.s8 %v775
  %v777 = vperm.slane %v771, %v776
  %v779 = vunpack.c.l.s4 1934713408
  %v780 = vunpack.c.0.s8 %v779
  %v781 = vperm.slane %v773, %v780
  %v782 = vrot.slane %v777, 4
  %v783 = vsel %vm738, %v782, %v765
  %v784 = vrot.slane %v765, 4
  %v785 = vsel %vm738, %v777, %v784
  %v786 = vrot.slane %v781, 4
  %v787 = vsel %vm738, %v786, %v769
  %v788 = vrot.slane %v769, 4
  %v789 = vsel %vm738, %v781, %v788
  %v790 = vrot.slane %v727, 4
  %v791 = vsel %vm738, 0.0, %v790
  %v793 = vunpack.c.l.s4 1983009808
  %v794 = vunpack.c.0.s8 %v793
  %v795 = vperm.slane %v727, %v794
  %v797 = vunpack.c.l.s4 1983009808
  %v798 = vunpack.c.0.s8 %v797
  %v799 = vperm.slane %v791, %v798
  %v800 = vrot.slane %v731, 4
  %v801 = vsel %vm738, 0.0, %v800
  %v803 = vunpack.c.l.s4 1983009808
  %v804 = vunpack.c.0.s8 %v803
  %v805 = vperm.slane %v731, %v804
  %v807 = vunpack.c.l.s4 1983009808
  %v808 = vunpack.c.0.s8 %v807
  %v809 = vperm.slane %v801, %v808
  %v810 = vrot.slane %v805, 4
  %v811 = vsel %vm738, %v810, %v795
  %v812 = vrot.slane %v795, 4
  %v813 = vsel %vm738, %v805, %v812
  %v815 = vunpack.c.l.s4 1934713408
  %v816 = vunpack.c.0.s8 %v815
  %v817 = vperm.slane %v811, %v816
  %v819 = vunpack.c.l.s4 1934713408
  %v820 = vunpack.c.0.s8 %v819
  %v821 = vperm.slane %v813, %v820
  %v822 = vrot.slane %v809, 4
  %v823 = vsel %vm738, %v822, %v799
  %v824 = vrot.slane %v799, 4
  %v825 = vsel %vm738, %v809, %v824
  %v827 = vunpack.c.l.s4 1934713408
  %v828 = vunpack.c.0.s8 %v827
  %v829 = vperm.slane %v823, %v828
  %v831 = vunpack.c.l.s4 1934713408
  %v832 = vunpack.c.0.s8 %v831
  %v833 = vperm.slane %v825, %v832
  %v834 = vrot.slane %v829, 4
  %v835 = vsel %vm738, %v834, %v817
  %v836 = vrot.slane %v817, 4
  %v837 = vsel %vm738, %v829, %v836
  %v838 = vrot.slane %v833, 4
  %v839 = vsel %vm738, %v838, %v821
  %v840 = vrot.slane %v821, 4
  %v841 = vsel %vm738, %v833, %v840
  %v843 = vunpack.c.l.s4 1983009808
  %v844 = vunpack.c.0.s8 %v843
  %v845 = vperm.slane %v715, %v844
  %v848 = vunpack.c.l.s4 1983009808
  %v849 = vunpack.c.0.s8 %v848
  %v850 = vperm.slane %v732, %v849
  %v851 = vrot.slane %v850, 4
  %v852 = vsel %vm738, %v851, %v845
  %v853 = vrot.slane %v845, 4
  %v854 = vsel %vm738, %v850, %v853
  %v856 = vunpack.c.l.s4 1934713408
  %v857 = vunpack.c.0.s8 %v856
  %v858 = vperm.slane %v852, %v857
  %v860 = vunpack.c.l.s4 1934713408
  %v861 = vunpack.c.0.s8 %v860
  %v862 = vperm.slane %v854, %v861
  %v863 = vrot.slane %v858, 4
  %v864 = vsel %vm738, 0.0, %v863
  %v865 = vrot.slane %v862, 4
  %v866 = vsel %vm738, 0.0, %v865
  %v867 = vld [vmem:[%s4] sm:$0xff]
  %v868 = vld [vmem:[%s4 + $0x8] sm:$0xff]
  %v869 = vld [vmem:[%s4 + $0x10] sm:$0xff]
  %v870 = vld [vmem:[%s4 + $0x18] sm:$0xff]
  %v871 = vld [vmem:[%s4 + $0x20] sm:$0xff]
  %v872 = vld [vmem:[%s4 + $0x28] sm:$0xff]
  %v873 = vld [vmem:[%s4 + $0x30] sm:$0xff]
  %v874 = vld [vmem:[%s4 + $0x38] sm:$0xff]
  %v875 = vld [vmem:[%s4 + $0x40] sm:$0xff]
  %v876 = vld [vmem:[%s4 + $0x48] sm:$0xff]
  %v877 = vld [vmem:[%s4 + $0x50] sm:$0xff]
  %v878 = vld [vmem:[%s4 + $0x58] sm:$0xff]
  %v879 = vld [vmem:[%s4 + $0x60] sm:$0xff]
  %v880 = vld [vmem:[%s4 + $0x68] sm:$0xff]
  %v881 = vld [vmem:[%s4 + $0x70] sm:$0xff]
  %v882 = vld [vmem:[%s4 + $0x78] sm:$0xff]
  %v883 = vld [vmem:[%s4 + $0x80] sm:$0xff]
  %v884 = vld [vmem:[%s4 + $0x88] sm:$0xff]
  %v885 = vld [vmem:[%s4 + $0x90] sm:$0xff]
  %v886 = vld [vmem:[%s4 + $0x98] sm:$0xff]
  %v887 = vld [vmem:[%s4 + $0xa0] sm:$0xff]
  %v888 = vld [vmem:[%s4 + $0xa8] sm:$0xff]
  %v889 = vld [vmem:[%s4 + $0xb0] sm:$0xff]
  %v890 = vld [vmem:[%s4 + $0xb8] sm:$0xff]
  %v891 = vld [vmem:[%s5] sm:$0x3]
  %v893 = vperm.slane %v891, 0
  %v894 = vperm.slane %v891, 1
  %v897 = vadd.f32 %v24, %v893
  %v898 = vadd.f32 %v25, %v894
  %v899 = vpack.c.bf16 %v783, %v783
  %v900 = vpack.c.bf16 %v785, %v785
  %v901 = vpack.c.bf16 %v787, %v787
  %v902 = vpack.c.bf16 %v789, %v789
  %907 = vst [vmem:[#allocation1] ss:$2 sm:$0xff] %v783
  %v908 = vld.sshfl [vmem:[#allocation1 + $0x8] sm:$0xff pattern:$0x75316420]
  %s909 = scalar_lea.vmem [#allocation1], 16
  %910 = vst [vmem:[%s909] ss:$2 sm:$0xff] %v785
  %v911 = vld.sshfl [vmem:[#allocation1 + $0x18] sm:$0xff pattern:$0x75316420]
  %s912 = scalar_lea.vmem [#allocation1], 32
  %913 = vst [vmem:[%s912] ss:$2 sm:$0xff] %v787
  %v914 = vld.sshfl [vmem:[#allocation1 + $0x28] sm:$0xff pattern:$0x75316420]
  %s915 = scalar_lea.vmem [#allocation1], 48
  %916 = vst [vmem:[%s915] ss:$2 sm:$0xff] %v789
  %v917 = vld.sshfl [vmem:[#allocation1 + $0x38] sm:$0xff pattern:$0x75316420]
  %918 = vrot.lane.b32.xlu0 %v908, 64
  %v919 = vpop.permute.xlu0 %918
  %920 = vrot.lane.b32.xlu0 %v911, 64
  %v921 = vpop.permute.xlu0 %920
  %922 = vrot.lane.b32.xlu0 %v914, 64
  %v923 = vpop.permute.xlu0 %922
  %924 = vrot.lane.b32.xlu0 %v917, 64
  %v925 = vpop.permute.xlu0 %924
  %v930 = vpack.c.bf16 %v919, %v919
  %v931 = vpack.c.bf16 %v921, %v921
  %v932 = vpack.c.bf16 %v923, %v923
  %v933 = vpack.c.bf16 %v925, %v925
  %vm934 = vcmask 523264
  %v936 = vsel %vm934, %v899, 0
  %v939 = vsel %vm934, %v930, 0
  %941 = vmatpush.bf16.xpose.msra.mxu0 0
  %942 = vmatpush.bf16.xpose.msra.mxu0 0
  %943 = vmatpush.bf16.xpose.msra.mxu0 0
  %944 = vmatpush.bf16.xpose.msra.mxu0 0
  %945 = vmatpush.bf16.xpose.msra.mxu0 0
  %946 = vmatpush.bf16.xpose.msra.mxu0 0
  %947 = vmatpush.bf16.xpose.msra.mxu0 0
  %948 = vmatpush.bf16.xpose.msra.mxu0 %v939
  %949 = vmatmul.bf16.gmra.mxu0 %v936
  %v950 = vpop.f32.mrf.mxu0
  %v951 = vadd.f32 0.0, %v950
  %v952 = vpop.f32.mrf.mxu0
  %953 = vdwg.mxu0
  %v955 = vsel %vm934, %v900, 0
  %v958 = vsel %vm934, %v931, 0
  %960 = vmatpush.bf16.xpose.msra.mxu0 0
  %961 = vmatpush.bf16.xpose.msra.mxu0 0
  %962 = vmatpush.bf16.xpose.msra.mxu0 0
  %963 = vmatpush.bf16.xpose.msra.mxu0 0
  %964 = vmatpush.bf16.xpose.msra.mxu0 0
  %965 = vmatpush.bf16.xpose.msra.mxu0 0
  %966 = vmatpush.bf16.xpose.msra.mxu0 0
  %967 = vmatpush.bf16.xpose.msra.mxu0 %v958
  %968 = vmatmul.bf16.gmra.mxu0 %v955
  %v969 = vpop.f32.mrf.mxu0
  %v970 = vadd.f32 0.0, %v969
  %v971 = vpop.f32.mrf.mxu0
  %972 = vdwg.mxu0
  %v974 = vsel %vm934, %v901, 0
  %v977 = vsel %vm934, %v932, 0
  %979 = vmatpush.bf16.xpose.msra.mxu0 0
  %980 = vmatpush.bf16.xpose.msra.mxu0 0
  %981 = vmatpush.bf16.xpose.msra.mxu0 0
  %982 = vmatpush.bf16.xpose.msra.mxu0 0
  %983 = vmatpush.bf16.xpose.msra.mxu0 0
  %984 = vmatpush.bf16.xpose.msra.mxu0 0
  %985 = vmatpush.bf16.xpose.msra.mxu0 0
  %986 = vmatpush.bf16.xpose.msra.mxu0 %v977
  %987 = vmatmul.bf16.gmra.mxu0 %v974
  %v988 = vpop.f32.mrf.mxu0
  %v989 = vadd.f32 0.0, %v988
  %v990 = vpop.f32.mrf.mxu0
  %991 = vdwg.mxu0
  %v993 = vsel %vm934, %v902, 0
  %v996 = vsel %vm934, %v933, 0
  %998 = vmatpush.bf16.xpose.msra.mxu0 0
  %999 = vmatpush.bf16.xpose.msra.mxu0 0
  %1000 = vmatpush.bf16.xpose.msra.mxu0 0
  %1001 = vmatpush.bf16.xpose.msra.mxu0 0
  %1002 = vmatpush.bf16.xpose.msra.mxu0 0
  %1003 = vmatpush.bf16.xpose.msra.mxu0 0
  %1004 = vmatpush.bf16.xpose.msra.mxu0 0
  %1005 = vmatpush.bf16.xpose.msra.mxu0 %v996
  %1006 = vmatmul.bf16.gmra.mxu0 %v993
  %v1007 = vpop.f32.mrf.mxu0
  %v1008 = vadd.f32 0.0, %v1007
  %v1009 = vpop.f32.mrf.mxu0
  %1010 = vdwg.mxu0
  %v1011 = vmul.f32 %v951, 0.125
  %v1012 = vmul.f32 %v970, 0.125
  %v1013 = vmul.f32 %v989, 0.125
  %v1014 = vmul.f32 %v1008, 0.125
  %vm1015 = vcmask 9216
  %v1016 = vsel %vm1015, %v1011, -inf
  %1017 = vmax.xlane.f32.xlu0 %v1016
  %v1018 = vpop.xlane.xlu0 %1017
  %v1019 = vsel %vm1015, %v1012, -inf
  %1020 = vmax.xlane.f32.xlu0 %v1019
  %v1021 = vpop.xlane.xlu0 %1020
  %v1022 = vsel %vm1015, %v1013, -inf
  %1023 = vmax.xlane.f32.xlu0 %v1022
  %v1024 = vpop.xlane.xlu0 %1023
  %v1025 = vsel %vm1015, %v1014, -inf
  %1026 = vmax.xlane.f32.xlu0 %v1025
  %v1027 = vpop.xlane.xlu0 %1026
  %v1028 = vsub.f32 %v1011, %v1018
  %v1029 = vsub.f32 %v1012, %v1021
  %v1030 = vsub.f32 %v1013, %v1024
  %v1031 = vsub.f32 %v1014, %v1027
  %v1032 = vmul.f32 %v1028, 1.442695
  %v1033 = vpow.pop %v1032
  %v1034 = vmul.f32 %v1029, 1.442695
  %v1035 = vpow.pop %v1034
  %v1036 = vmul.f32 %v1030, 1.442695
  %v1037 = vpow.pop %v1036
  %v1038 = vmul.f32 %v1031, 1.442695
  %v1039 = vpow.pop %v1038
  %v1040 = vsel %vm1015, %v1033, 0.0
  %1041 = vadd.xlane.f32.xlu0 %v1040
  %v1042 = vpop.xlane.xlu0 %1041
  %v1043 = vsel %vm1015, %v1035, 0.0
  %1044 = vadd.xlane.f32.xlu0 %v1043
  %v1045 = vpop.xlane.xlu0 %1044
  %v1046 = vsel %vm1015, %v1037, 0.0
  %1047 = vadd.xlane.f32.xlu0 %v1046
  %v1048 = vpop.xlane.xlu0 %1047
  %v1049 = vsel %vm1015, %v1039, 0.0
  %1050 = vadd.xlane.f32.xlu0 %v1049
  %v1051 = vpop.xlane.xlu0 %1050
  %v1052 = vrcp.pop %v1042
  %v1053 = vrcp.pop %v1045
  %v1054 = vrcp.pop %v1048
  %v1055 = vrcp.pop %v1051
  %v1056 = vmul.f32 %v1033, %v1052
  %v1057 = vmul.f32 %v1035, %v1053
  %v1058 = vmul.f32 %v1037, %v1054
  %v1059 = vmul.f32 %v1039, %v1055
  %v1060 = vpack.c.bf16 %v1056, %v1056
  %v1061 = vpack.c.bf16 %v1057, %v1057
  %v1062 = vpack.c.bf16 %v1058, %v1058
  %v1063 = vpack.c.bf16 %v1059, %v1059
  %1068 = vst [vmem:[#allocation1] ss:$2 sm:$0xff] %v835
  %v1069 = vld.sshfl [vmem:[#allocation1 + $0x8] sm:$0xff pattern:$0x75316420]
  %s1070 = scalar_lea.vmem [#allocation1], 16
  %1071 = vst [vmem:[%s1070] ss:$2 sm:$0xff] %v837
  %v1072 = vld.sshfl [vmem:[#allocation1 + $0x18] sm:$0xff pattern:$0x75316420]
  %s1073 = scalar_lea.vmem [#allocation1], 32
  %1074 = vst [vmem:[%s1073] ss:$2 sm:$0xff] %v839
  %v1075 = vld.sshfl [vmem:[#allocation1 + $0x28] sm:$0xff pattern:$0x75316420]
  %s1076 = scalar_lea.vmem [#allocation1], 48
  %1077 = vst [vmem:[%s1076] ss:$2 sm:$0xff] %v841
  %v1078 = vld.sshfl [vmem:[#allocation1 + $0x38] sm:$0xff pattern:$0x75316420]
  %v1083 = vpack.c.bf16 %v1069, %v1069
  %v1084 = vpack.c.bf16 %v1072, %v1072
  %v1085 = vpack.c.bf16 %v1075, %v1075
  %v1086 = vpack.c.bf16 %v1078, %v1078
  %vm1087 = vcmask 15360
  %v1089 = vsel %vm1087, %v1060, 0
  %vm1091 = vcmask 1040384
  %v1093 = vsel %vm1091, %v1083, 0
  %1095 = vmatpush.bf16.msra.mxu0 0
  %1096 = vmatpush.bf16.msra.mxu0 0
  %1097 = vmatpush.bf16.msra.mxu0 0
  %1098 = vmatpush.bf16.msra.mxu0 0
  %1099 = vmatpush.bf16.msra.mxu0 0
  %1100 = vmatpush.bf16.msra.mxu0 0
  %1101 = vmatpush.bf16.msra.mxu0 0
  %1102 = vmatpush.bf16.msra.mxu0 %v1093
  %1103 = vmatmul.bf16.gmra.mxu0 %v1089
  %v1104 = vpop.f32.mrf.mxu0
  %v1105 = vadd.f32 0.0, %v1104
  %v1106 = vpop.f32.mrf.mxu0
  %1107 = vdwg.mxu0
  %v1109 = vsel %vm1087, %v1061, 0
  %v1112 = vsel %vm1091, %v1084, 0
  %1114 = vmatpush.bf16.msra.mxu0 0
  %1115 = vmatpush.bf16.msra.mxu0 0
  %1116 = vmatpush.bf16.msra.mxu0 0
  %1117 = vmatpush.bf16.msra.mxu0 0
  %1118 = vmatpush.bf16.msra.mxu0 0
  %1119 = vmatpush.bf16.msra.mxu0 0
  %1120 = vmatpush.bf16.msra.mxu0 0
  %1121 = vmatpush.bf16.msra.mxu0 %v1112
  %1122 = vmatmul.bf16.gmra.mxu0 %v1109
  %v1123 = vpop.f32.mrf.mxu0
  %v1124 = vadd.f32 0.0, %v1123
  %v1125 = vpop.f32.mrf.mxu0
  %1126 = vdwg.mxu0
  %v1128 = vsel %vm1087, %v1062, 0
  %v1131 = vsel %vm1091, %v1085, 0
  %1133 = vmatpush.bf16.msra.mxu0 0
  %1134 = vmatpush.bf16.msra.mxu0 0
  %1135 = vmatpush.bf16.msra.mxu0 0
  %1136 = vmatpush.bf16.msra.mxu0 0
  %1137 = vmatpush.bf16.msra.mxu0 0
  %1138 = vmatpush.bf16.msra.mxu0 0
  %1139 = vmatpush.bf16.msra.mxu0 0
  %1140 = vmatpush.bf16.msra.mxu0 %v1131
  %1141 = vmatmul.bf16.gmra.mxu0 %v1128
  %v1142 = vpop.f32.mrf.mxu0
  %v1143 = vadd.f32 0.0, %v1142
  %v1144 = vpop.f32.mrf.mxu0
  %1145 = vdwg.mxu0
  %v1147 = vsel %vm1087, %v1063, 0
  %v1150 = vsel %vm1091, %v1086, 0
  %1152 = vmatpush.bf16.msra.mxu0 0
  %1153 = vmatpush.bf16.msra.mxu0 0
  %1154 = vmatpush.bf16.msra.mxu0 0
  %1155 = vmatpush.bf16.msra.mxu0 0
  %1156 = vmatpush.bf16.msra.mxu0 0
  %1157 = vmatpush.bf16.msra.mxu0 0
  %1158 = vmatpush.bf16.msra.mxu0 0
  %1159 = vmatpush.bf16.msra.mxu0 %v1150
  %1160 = vmatmul.bf16.gmra.mxu0 %v1147
  %v1161 = vpop.f32.mrf.mxu0
  %v1162 = vadd.f32 0.0, %v1161
  %v1163 = vpop.f32.mrf.mxu0
  %1164 = vdwg.mxu0
  %v1165 = vrot.slane %v1143, 4
  %v1166 = vsel %vm738, %v1165, %v1105
  %v1168 = vunpack.c.l.s4 1983009808
  %v1169 = vunpack.c.0.s8 %v1168
  %v1170 = vperm.slane %v1166, %v1169
  %v1171 = vrot.slane %v1162, 4
  %v1172 = vsel %vm738, %v1171, %v1124
  %v1174 = vunpack.c.l.s4 1983009808
  %v1175 = vunpack.c.0.s8 %v1174
  %v1176 = vperm.slane %v1172, %v1175
  %v1177 = vrot.slane %v1176, 4
  %v1178 = vsel %vm738, %v1177, %v1170
  %v1180 = vunpack.c.l.s4 1934713408
  %v1181 = vunpack.c.0.s8 %v1180
  %v1182 = vperm.slane %v1178, %v1181
  %v1183 = vrot.slane %v1182, 4
  %v1184 = vsel %vm738, 0.0, %v1183
  %1187 = vst [vmem:[#allocation1] ss:$2 sm:$0xff] %v1182
  %s1188 = scalar_lea.vmem [#allocation1], 1
  %1189 = vst [vmem:[%s1188] ss:$2 sm:$0xff] %v1184
  %v1190 = vld.sshfl [vmem:[#allocation1] sm:$0xff pattern:$0x75316420]
  %v1192 = vpack.c.bf16 %v1190, %v1190
  %v1201 = vunpack.c.l.b16 %v867
  %v1202 = vunpack.c.h.b16 %v867
  %v1203 = vunpack.c.l.b16 %v868
  %v1204 = vunpack.c.h.b16 %v868
  %v1205 = vunpack.c.l.b16 %v869
  %v1206 = vunpack.c.h.b16 %v869
  %v1207 = vunpack.c.l.b16 %v870
  %v1208 = vunpack.c.h.b16 %v870
  %v1209 = vunpack.c.l.b16 %v871
  %v1210 = vunpack.c.h.b16 %v871
  %v1211 = vunpack.c.l.b16 %v872
  %v1212 = vunpack.c.h.b16 %v872
  %v1213 = vunpack.c.l.b16 %v873
  %v1214 = vunpack.c.h.b16 %v873
  %v1215 = vunpack.c.l.b16 %v874
  %v1216 = vunpack.c.h.b16 %v874
  %v1217 = vpack.c.b16 %v1203, %v1201
  %v1218 = vpack.c.b16 %v1204, %v1202
  %v1219 = vpack.c.b16 %v1207, %v1205
  %v1220 = vpack.c.b16 %v1208, %v1206
  %v1221 = vpack.c.b16 %v1211, %v1209
  %v1222 = vpack.c.b16 %v1212, %v1210
  %v1223 = vpack.c.b16 %v1215, %v1213
  %v1224 = vpack.c.b16 %v1216, %v1214
  %v1234 = vsel %vm934, %v1192, 0
  %1236 = vmatpush.bf16.msra.mxu0 0
  %1237 = vmatpush.bf16.msra.mxu0 0
  %1238 = vmatpush.bf16.msra.mxu0 0
  %1239 = vmatpush.bf16.msra.mxu0 0
  %1240 = vmatpush.bf16.msra.mxu0 %v1223
  %1241 = vmatpush.bf16.msra.mxu0 %v1221
  %1242 = vmatpush.bf16.msra.mxu0 %v1219
  %1243 = vmatpush.bf16.msra.mxu0 %v1217
  %1244 = vmatmul.bf16.gmra.mxu0 %v1234
  %v1245 = vpop.f32.mrf.mxu0
  %v1246 = vadd.f32 0.0, %v1245
  %v1247 = vpop.f32.mrf.mxu0
  %1248 = vdwg.mxu0
  %1249 = vmatpush.bf16.msra.mxu0 0
  %1250 = vmatpush.bf16.msra.mxu0 0
  %1251 = vmatpush.bf16.msra.mxu0 0
  %1252 = vmatpush.bf16.msra.mxu0 0
  %1253 = vmatpush.bf16.msra.mxu0 %v1224
  %1254 = vmatpush.bf16.msra.mxu0 %v1222
  %1255 = vmatpush.bf16.msra.mxu0 %v1220
  %1256 = vmatpush.bf16.msra.mxu0 %v1218
  %1257 = vmatmul.bf16.gmra.mxu0 %v1234
  %v1258 = vpop.f32.mrf.mxu0
  %v1259 = vadd.f32 0.0, %v1258
  %v1260 = vpop.f32.mrf.mxu0
  %1261 = vdwg.mxu0
  %v1262 = vadd.f32 %v897, %v1246
  %v1263 = vadd.f32 %v898, %v1259
  %v1264 = vpack.c.bf16 %v835, %v835
  %v1265 = vpack.c.bf16 %v837, %v837
  %v1266 = vpack.c.bf16 %v839, %v839
  %v1267 = vpack.c.bf16 %v841, %v841
  %v1269 = vunpack.c.l.b16 %v899
  %v1270 = vpack.c.b16 %v1269, %v1269
  %1271 = vrot.lane.b32.xlu0 %v1270, 64
  %v1272 = vpop.permute.xlu0 %1271
  %v1274 = vsel %vm934, %v1272, 0
  %v1277 = vsel %vm934, %v1264, 0
  %1279 = vmatpush.bf16.xpose.msra.mxu0 0
  %1280 = vmatpush.bf16.xpose.msra.mxu0 0
  %1281 = vmatpush.bf16.xpose.msra.mxu0 0
  %1282 = vmatpush.bf16.xpose.msra.mxu0 0
  %1283 = vmatpush.bf16.xpose.msra.mxu0 0
  %1284 = vmatpush.bf16.xpose.msra.mxu0 0
  %1285 = vmatpush.bf16.xpose.msra.mxu0 0
  %1286 = vmatpush.bf16.xpose.msra.mxu0 %v1277
  %1287 = vmatmul.bf16.gmra.mxu0 %v1274
  %v1288 = vpop.f32.mrf.mxu0
  %v1289 = vadd.f32 0.0, %v1288
  %v1290 = vpop.f32.mrf.mxu0
  %1291 = vdwg.mxu0
  %v1293 = vunpack.c.l.b16 %v900
  %v1294 = vpack.c.b16 %v1293, %v1293
  %1295 = vrot.lane.b32.xlu0 %v1294, 64
  %v1296 = vpop.permute.xlu0 %1295
  %v1298 = vsel %vm934, %v1296, 0
  %v1301 = vsel %vm934, %v1265, 0
  %1303 = vmatpush.bf16.xpose.msra.mxu0 0
  %1304 = vmatpush.bf16.xpose.msra.mxu0 0
  %1305 = vmatpush.bf16.xpose.msra.mxu0 0
  %1306 = vmatpush.bf16.xpose.msra.mxu0 0
  %1307 = vmatpush.bf16.xpose.msra.mxu0 0
  %1308 = vmatpush.bf16.xpose.msra.mxu0 0
  %1309 = vmatpush.bf16.xpose.msra.mxu0 0
  %1310 = vmatpush.bf16.xpose.msra.mxu0 %v1301
  %1311 = vmatmul.bf16.gmra.mxu0 %v1298
  %v1312 = vpop.f32.mrf.mxu0
  %v1313 = vadd.f32 0.0, %v1312
  %v1314 = vpop.f32.mrf.mxu0
  %1315 = vdwg.mxu0
  %v1317 = vunpack.c.l.b16 %v901
  %v1318 = vpack.c.b16 %v1317, %v1317
  %1319 = vrot.lane.b32.xlu0 %v1318, 64
  %v1320 = vpop.permute.xlu0 %1319
  %v1322 = vsel %vm934, %v1320, 0
  %v1325 = vsel %vm934, %v1266, 0
  %1327 = vmatpush.bf16.xpose.msra.mxu0 0
  %1328 = vmatpush.bf16.xpose.msra.mxu0 0
  %1329 = vmatpush.bf16.xpose.msra.mxu0 0
  %1330 = vmatpush.bf16.xpose.msra.mxu0 0
  %1331 = vmatpush.bf16.xpose.msra.mxu0 0
  %1332 = vmatpush.bf16.xpose.msra.mxu0 0
  %1333 = vmatpush.bf16.xpose.msra.mxu0 0
  %1334 = vmatpush.bf16.xpose.msra.mxu0 %v1325
  %1335 = vmatmul.bf16.gmra.mxu0 %v1322
  %v1336 = vpop.f32.mrf.mxu0
  %v1337 = vadd.f32 0.0, %v1336
  %v1338 = vpop.f32.mrf.mxu0
  %1339 = vdwg.mxu0
  %v1341 = vunpack.c.l.b16 %v902
  %v1342 = vpack.c.b16 %v1341, %v1341
  %1343 = vrot.lane.b32.xlu0 %v1342, 64
  %v1344 = vpop.permute.xlu0 %1343
  %v1346 = vsel %vm934, %v1344, 0
  %v1349 = vsel %vm934, %v1267, 0
  %1351 = vmatpush.bf16.xpose.msra.mxu0 0
  %1352 = vmatpush.bf16.xpose.msra.mxu0 0
  %1353 = vmatpush.bf16.xpose.msra.mxu0 0
  %1354 = vmatpush.bf16.xpose.msra.mxu0 0
  %1355 = vmatpush.bf16.xpose.msra.mxu0 0
  %1356 = vmatpush.bf16.xpose.msra.mxu0 0
  %1357 = vmatpush.bf16.xpose.msra.mxu0 0
  %1358 = vmatpush.bf16.xpose.msra.mxu0 %v1349
  %1359 = vmatmul.bf16.gmra.mxu0 %v1346
  %v1360 = vpop.f32.mrf.mxu0
  %v1361 = vadd.f32 0.0, %v1360
  %v1362 = vpop.f32.mrf.mxu0
  %1363 = vdwg.mxu0
  %v1364 = vmul.f32 %v1289, 0.125
  %v1365 = vmul.f32 %v1313, 0.125
  %v1366 = vmul.f32 %v1337, 0.125
  %v1367 = vmul.f32 %v1361, 0.125
  %v1368 = vsel %vm1015, %v1364, -inf
  %1369 = vmax.xlane.f32.xlu0 %v1368
  %v1370 = vpop.xlane.xlu0 %1369
  %v1371 = vsel %vm1015, %v1365, -inf
  %1372 = vmax.xlane.f32.xlu0 %v1371
  %v1373 = vpop.xlane.xlu0 %1372
  %v1374 = vsel %vm1015, %v1366, -inf
  %1375 = vmax.xlane.f32.xlu0 %v1374
  %v1376 = vpop.xlane.xlu0 %1375
  %v1377 = vsel %vm1015, %v1367, -inf
  %1378 = vmax.xlane.f32.xlu0 %v1377
  %v1379 = vpop.xlane.xlu0 %1378
  %v1380 = vsub.f32 %v1364, %v1370
  %v1381 = vsub.f32 %v1365, %v1373
  %v1382 = vsub.f32 %v1366, %v1376
  %v1383 = vsub.f32 %v1367, %v1379
  %v1384 = vmul.f32 %v1380, 1.442695
  %v1385 = vpow.pop %v1384
  %v1386 = vmul.f32 %v1381, 1.442695
  %v1387 = vpow.pop %v1386
  %v1388 = vmul.f32 %v1382, 1.442695
  %v1389 = vpow.pop %v1388
  %v1390 = vmul.f32 %v1383, 1.442695
  %v1391 = vpow.pop %v1390
  %v1392 = vsel %vm1015, %v1385, 0.0
  %1393 = vadd.xlane.f32.xlu0 %v1392
  %v1394 = vpop.xlane.xlu0 %1393
  %v1395 = vsel %vm1015, %v1387, 0.0
  %1396 = vadd.xlane.f32.xlu0 %v1395
  %v1397 = vpop.xlane.xlu0 %1396
  %v1398 = vsel %vm1015, %v1389, 0.0
  %1399 = vadd.xlane.f32.xlu0 %v1398
  %v1400 = vpop.xlane.xlu0 %1399
  %v1401 = vsel %vm1015, %v1391, 0.0
  %1402 = vadd.xlane.f32.xlu0 %v1401
  %v1403 = vpop.xlane.xlu0 %1402
  %v1404 = vrcp.pop %v1394
  %v1405 = vrcp.pop %v1397
  %v1406 = vrcp.pop %v1400
  %v1407 = vrcp.pop %v1403
  %v1408 = vmul.f32 %v1385, %v1404
  %v1409 = vmul.f32 %v1387, %v1405
  %v1410 = vmul.f32 %v1389, %v1406
  %v1411 = vmul.f32 %v1391, %v1407
  %v1412 = vpack.c.bf16 %v1408, %v1408
  %v1413 = vpack.c.bf16 %v1409, %v1409
  %v1414 = vpack.c.bf16 %v1410, %v1410
  %v1415 = vpack.c.bf16 %v1411, %v1411
  %1416 = vst [vmem:[#allocation1] ss:$2 sm:$0xff] %v835
  %v1417 = vld.sshfl [vmem:[#allocation1 + $0x8] sm:$0xff pattern:$0x75316420]
  %s1418 = scalar_lea.vmem [#allocation1], 16
  %1419 = vst [vmem:[%s1418] ss:$2 sm:$0xff] %v837
  %v1420 = vld.sshfl [vmem:[#allocation1 + $0x18] sm:$0xff pattern:$0x75316420]
  %s1421 = scalar_lea.vmem [#allocation1], 32
  %1422 = vst [vmem:[%s1421] ss:$2 sm:$0xff] %v839
  %v1423 = vld.sshfl [vmem:[#allocation1 + $0x28] sm:$0xff pattern:$0x75316420]
  %s1424 = scalar_lea.vmem [#allocation1], 48
  %1425 = vst [vmem:[%s1424] ss:$2 sm:$0xff] %v841
  %v1426 = vld.sshfl [vmem:[#allocation1 + $0x38] sm:$0xff pattern:$0x75316420]
  %1427 = vrot.lane.b32.xlu0 %v1417, 64
  %v1428 = vpop.permute.xlu0 %1427
  %1429 = vrot.lane.b32.xlu0 %v1420, 64
  %v1430 = vpop.permute.xlu0 %1429
  %1431 = vrot.lane.b32.xlu0 %v1423, 64
  %v1432 = vpop.permute.xlu0 %1431
  %1433 = vrot.lane.b32.xlu0 %v1426, 64
  %v1434 = vpop.permute.xlu0 %1433
  %v1439 = vpack.c.bf16 %v1428, %v1428
  %v1440 = vpack.c.bf16 %v1430, %v1430
  %v1441 = vpack.c.bf16 %v1432, %v1432
  %v1442 = vpack.c.bf16 %v1434, %v1434
  %v1444 = vsel %vm1087, %v1412, 0
  %v1447 = vsel %vm1091, %v1439, 0
  %1449 = vmatpush.bf16.msra.mxu0 0
  %1450 = vmatpush.bf16.msra.mxu0 0
  %1451 = vmatpush.bf16.msra.mxu0 0
  %1452 = vmatpush.bf16.msra.mxu0 0
  %1453 = vmatpush.bf16.msra.mxu0 0
  %1454 = vmatpush.bf16.msra.mxu0 0
  %1455 = vmatpush.bf16.msra.mxu0 0
  %1456 = vmatpush.bf16.msra.mxu0 %v1447
  %1457 = vmatmul.bf16.gmra.mxu0 %v1444
  %v1458 = vpop.f32.mrf.mxu0
  %v1459 = vadd.f32 0.0, %v1458
  %v1460 = vpop.f32.mrf.mxu0
  %1461 = vdwg.mxu0
  %v1463 = vsel %vm1087, %v1413, 0
  %v1466 = vsel %vm1091, %v1440, 0
  %1468 = vmatpush.bf16.msra.mxu0 0
  %1469 = vmatpush.bf16.msra.mxu0 0
  %1470 = vmatpush.bf16.msra.mxu0 0
  %1471 = vmatpush.bf16.msra.mxu0 0
  %1472 = vmatpush.bf16.msra.mxu0 0
  %1473 = vmatpush.bf16.msra.mxu0 0
  %1474 = vmatpush.bf16.msra.mxu0 0
  %1475 = vmatpush.bf16.msra.mxu0 %v1466
  %1476 = vmatmul.bf16.gmra.mxu0 %v1463
  %v1477 = vpop.f32.mrf.mxu0
  %v1478 = vadd.f32 0.0, %v1477
  %v1479 = vpop.f32.mrf.mxu0
  %1480 = vdwg.mxu0
  %v1482 = vsel %vm1087, %v1414, 0
  %v1485 = vsel %vm1091, %v1441, 0
  %1487 = vmatpush.bf16.msra.mxu0 0
  %1488 = vmatpush.bf16.msra.mxu0 0
  %1489 = vmatpush.bf16.msra.mxu0 0
  %1490 = vmatpush.bf16.msra.mxu0 0
  %1491 = vmatpush.bf16.msra.mxu0 0
  %1492 = vmatpush.bf16.msra.mxu0 0
  %1493 = vmatpush.bf16.msra.mxu0 0
  %1494 = vmatpush.bf16.msra.mxu0 %v1485
  %1495 = vmatmul.bf16.gmra.mxu0 %v1482
  %v1496 = vpop.f32.mrf.mxu0
  %v1497 = vadd.f32 0.0, %v1496
  %v1498 = vpop.f32.mrf.mxu0
  %1499 = vdwg.mxu0
  %v1501 = vsel %vm1087, %v1415, 0
  %v1504 = vsel %vm1091, %v1442, 0
  %1506 = vmatpush.bf16.msra.mxu0 0
  %1507 = vmatpush.bf16.msra.mxu0 0
  %1508 = vmatpush.bf16.msra.mxu0 0
  %1509 = vmatpush.bf16.msra.mxu0 0
  %1510 = vmatpush.bf16.msra.mxu0 0
  %1511 = vmatpush.bf16.msra.mxu0 0
  %1512 = vmatpush.bf16.msra.mxu0 0
  %1513 = vmatpush.bf16.msra.mxu0 %v1504
  %1514 = vmatmul.bf16.gmra.mxu0 %v1501
  %v1515 = vpop.f32.mrf.mxu0
  %v1516 = vadd.f32 0.0, %v1515
  %v1517 = vpop.f32.mrf.mxu0
  %1518 = vdwg.mxu0
  %v1519 = vrot.slane %v1497, 4
  %v1520 = vsel %vm738, %v1519, %v1459
  %v1522 = vunpack.c.l.s4 1983009808
  %v1523 = vunpack.c.0.s8 %v1522
  %v1524 = vperm.slane %v1520, %v1523
  %v1525 = vrot.slane %v1516, 4
  %v1526 = vsel %vm738, %v1525, %v1478
  %v1528 = vunpack.c.l.s4 1983009808
  %v1529 = vunpack.c.0.s8 %v1528
  %v1530 = vperm.slane %v1526, %v1529
  %v1531 = vrot.slane %v1530, 4
  %v1532 = vsel %vm738, %v1531, %v1524
  %v1534 = vunpack.c.l.s4 1934713408
  %v1535 = vunpack.c.0.s8 %v1534
  %v1536 = vperm.slane %v1532, %v1535
  %v1537 = vrot.slane %v1536, 4
  %v1538 = vsel %vm738, 0.0, %v1537
  %1541 = vst [vmem:[#allocation1] ss:$2 sm:$0xff] %v1536
  %s1542 = scalar_lea.vmem [#allocation1], 1
  %1543 = vst [vmem:[%s1542] ss:$2 sm:$0xff] %v1538
  %v1544 = vld.sshfl [vmem:[#allocation1] sm:$0xff pattern:$0x75316420]
  %v1546 = vpack.c.bf16 %v1544, %v1544
  %v1555 = vunpack.c.l.b16 %v875
  %v1556 = vunpack.c.h.b16 %v875
  %v1557 = vunpack.c.l.b16 %v876
  %v1558 = vunpack.c.h.b16 %v876
  %v1559 = vunpack.c.l.b16 %v877
  %v1560 = vunpack.c.h.b16 %v877
  %v1561 = vunpack.c.l.b16 %v878
  %v1562 = vunpack.c.h.b16 %v878
  %v1563 = vunpack.c.l.b16 %v879
  %v1564 = vunpack.c.h.b16 %v879
  %v1565 = vunpack.c.l.b16 %v880
  %v1566 = vunpack.c.h.b16 %v880
  %v1567 = vunpack.c.l.b16 %v881
  %v1568 = vunpack.c.h.b16 %v881
  %v1569 = vunpack.c.l.b16 %v882
  %v1570 = vunpack.c.h.b16 %v882
  %v1571 = vpack.c.b16 %v1557, %v1555
  %v1572 = vpack.c.b16 %v1558, %v1556
  %v1573 = vpack.c.b16 %v1561, %v1559
  %v1574 = vpack.c.b16 %v1562, %v1560
  %v1575 = vpack.c.b16 %v1565, %v1563
  %v1576 = vpack.c.b16 %v1566, %v1564
  %v1577 = vpack.c.b16 %v1569, %v1567
  %v1578 = vpack.c.b16 %v1570, %v1568
  %v1588 = vsel %vm934, %v1546, 0
  %1590 = vmatpush.bf16.msra.mxu0 0
  %1591 = vmatpush.bf16.msra.mxu0 0
  %1592 = vmatpush.bf16.msra.mxu0 0
  %1593 = vmatpush.bf16.msra.mxu0 0
  %1594 = vmatpush.bf16.msra.mxu0 %v1577
  %1595 = vmatpush.bf16.msra.mxu0 %v1575
  %1596 = vmatpush.bf16.msra.mxu0 %v1573
  %1597 = vmatpush.bf16.msra.mxu0 %v1571
  %1598 = vmatmul.bf16.gmra.mxu0 %v1588
  %v1599 = vpop.f32.mrf.mxu0
  %v1600 = vadd.f32 0.0, %v1599
  %v1601 = vpop.f32.mrf.mxu0
  %1602 = vdwg.mxu0
  %1603 = vmatpush.bf16.msra.mxu0 0
  %1604 = vmatpush.bf16.msra.mxu0 0
  %1605 = vmatpush.bf16.msra.mxu0 0
  %1606 = vmatpush.bf16.msra.mxu0 0
  %1607 = vmatpush.bf16.msra.mxu0 %v1578
  %1608 = vmatpush.bf16.msra.mxu0 %v1576
  %1609 = vmatpush.bf16.msra.mxu0 %v1574
  %1610 = vmatpush.bf16.msra.mxu0 %v1572
  %1611 = vmatmul.bf16.gmra.mxu0 %v1588
  %v1612 = vpop.f32.mrf.mxu0
  %v1613 = vadd.f32 0.0, %v1612
  %v1614 = vpop.f32.mrf.mxu0
  %1615 = vdwg.mxu0
  %v1616 = vadd.f32 %v1262, %v1600
  %v1617 = vadd.f32 %v1263, %v1613
  %1618 = vst [vmem:[#allocation1] ss:$2 sm:$0xff] %v783
  %v1619 = vld.sshfl [vmem:[#allocation1 + $0x8] sm:$0xff pattern:$0x75316420]
  %s1620 = scalar_lea.vmem [#allocation1], 16
  %1621 = vst [vmem:[%s1620] ss:$2 sm:$0xff] %v785
  %v1622 = vld.sshfl [vmem:[#allocation1 + $0x18] sm:$0xff pattern:$0x75316420]
  %s1623 = scalar_lea.vmem [#allocation1], 32
  %1624 = vst [vmem:[%s1623] ss:$2 sm:$0xff] %v787
  %v1625 = vld.sshfl [vmem:[#allocation1 + $0x28] sm:$0xff pattern:$0x75316420]
  %s1626 = scalar_lea.vmem [#allocation1], 48
  %1627 = vst [vmem:[%s1626] ss:$2 sm:$0xff] %v789
  %v1628 = vld.sshfl [vmem:[#allocation1 + $0x38] sm:$0xff pattern:$0x75316420]
  %v1633 = vpack.c.bf16 %v1619, %v1619
  %v1634 = vpack.c.bf16 %v1622, %v1622
  %v1635 = vpack.c.bf16 %v1625, %v1625
  %v1636 = vpack.c.bf16 %v1628, %v1628
  %v1638 = vunpack.c.l.b16 %v1264
  %v1639 = vpack.c.b16 %v1638, %v1638
  %1640 = vrot.lane.b32.xlu0 %v1639, 64
  %v1641 = vpop.permute.xlu0 %1640
  %v1643 = vsel %vm934, %v1633, 0
  %v1646 = vsel %vm934, %v1641, 0
  %1648 = vmatpush.bf16.xpose.msra.mxu0 0
  %1649 = vmatpush.bf16.xpose.msra.mxu0 0
  %1650 = vmatpush.bf16.xpose.msra.mxu0 0
  %1651 = vmatpush.bf16.xpose.msra.mxu0 0
  %1652 = vmatpush.bf16.xpose.msra.mxu0 0
  %1653 = vmatpush.bf16.xpose.msra.mxu0 0
  %1654 = vmatpush.bf16.xpose.msra.mxu0 0
  %1655 = vmatpush.bf16.xpose.msra.mxu0 %v1646
  %1656 = vmatmul.bf16.gmra.mxu0 %v1643
  %v1657 = vpop.f32.mrf.mxu0
  %v1658 = vadd.f32 0.0, %v1657
  %v1659 = vpop.f32.mrf.mxu0
  %1660 = vdwg.mxu0
  %v1662 = vunpack.c.l.b16 %v1265
  %v1663 = vpack.c.b16 %v1662, %v1662
  %1664 = vrot.lane.b32.xlu0 %v1663, 64
  %v1665 = vpop.permute.xlu0 %1664
  %v1667 = vsel %vm934, %v1634, 0
  %v1670 = vsel %vm934, %v1665, 0
  %1672 = vmatpush.bf16.xpose.msra.mxu0 0
  %1673 = vmatpush.bf16.xpose.msra.mxu0 0
  %1674 = vmatpush.bf16.xpose.msra.mxu0 0
  %1675 = vmatpush.bf16.xpose.msra.mxu0 0
  %1676 = vmatpush.bf16.xpose.msra.mxu0 0
  %1677 = vmatpush.bf16.xpose.msra.mxu0 0
  %1678 = vmatpush.bf16.xpose.msra.mxu0 0
  %1679 = vmatpush.bf16.xpose.msra.mxu0 %v1670
  %1680 = vmatmul.bf16.gmra.mxu0 %v1667
  %v1681 = vpop.f32.mrf.mxu0
  %v1682 = vadd.f32 0.0, %v1681
  %v1683 = vpop.f32.mrf.mxu0
  %1684 = vdwg.mxu0
  %v1686 = vunpack.c.l.b16 %v1266
  %v1687 = vpack.c.b16 %v1686, %v1686
  %1688 = vrot.lane.b32.xlu0 %v1687, 64
  %v1689 = vpop.permute.xlu0 %1688
  %v1691 = vsel %vm934, %v1635, 0
  %v1694 = vsel %vm934, %v1689, 0
  %1696 = vmatpush.bf16.xpose.msra.mxu0 0
  %1697 = vmatpush.bf16.xpose.msra.mxu0 0
  %1698 = vmatpush.bf16.xpose.msra.mxu0 0
  %1699 = vmatpush.bf16.xpose.msra.mxu0 0
  %1700 = vmatpush.bf16.xpose.msra.mxu0 0
  %1701 = vmatpush.bf16.xpose.msra.mxu0 0
  %1702 = vmatpush.bf16.xpose.msra.mxu0 0
  %1703 = vmatpush.bf16.xpose.msra.mxu0 %v1694
  %1704 = vmatmul.bf16.gmra.mxu0 %v1691
  %v1705 = vpop.f32.mrf.mxu0
  %v1706 = vadd.f32 0.0, %v1705
  %v1707 = vpop.f32.mrf.mxu0
  %1708 = vdwg.mxu0
  %v1710 = vunpack.c.l.b16 %v1267
  %v1711 = vpack.c.b16 %v1710, %v1710
  %1712 = vrot.lane.b32.xlu0 %v1711, 64
  %v1713 = vpop.permute.xlu0 %1712
  %v1715 = vsel %vm934, %v1636, 0
  %v1718 = vsel %vm934, %v1713, 0
  %1720 = vmatpush.bf16.xpose.msra.mxu0 0
  %1721 = vmatpush.bf16.xpose.msra.mxu0 0
  %1722 = vmatpush.bf16.xpose.msra.mxu0 0
  %1723 = vmatpush.bf16.xpose.msra.mxu0 0
  %1724 = vmatpush.bf16.xpose.msra.mxu0 0
  %1725 = vmatpush.bf16.xpose.msra.mxu0 0
  %1726 = vmatpush.bf16.xpose.msra.mxu0 0
  %1727 = vmatpush.bf16.xpose.msra.mxu0 %v1718
  %1728 = vmatmul.bf16.gmra.mxu0 %v1715
  %v1729 = vpop.f32.mrf.mxu0
  %v1730 = vadd.f32 0.0, %v1729
  %v1731 = vpop.f32.mrf.mxu0
  %1732 = vdwg.mxu0
  %v1733 = vmul.f32 %v1658, 0.125
  %v1734 = vmul.f32 %v1682, 0.125
  %v1735 = vmul.f32 %v1706, 0.125
  %v1736 = vmul.f32 %v1730, 0.125
  %v1737 = vsel %vm1015, %v1733, -inf
  %1738 = vmax.xlane.f32.xlu0 %v1737
  %v1739 = vpop.xlane.xlu0 %1738
  %v1740 = vsel %vm1015, %v1734, -inf
  %1741 = vmax.xlane.f32.xlu0 %v1740
  %v1742 = vpop.xlane.xlu0 %1741
  %v1743 = vsel %vm1015, %v1735, -inf
  %1744 = vmax.xlane.f32.xlu0 %v1743
  %v1745 = vpop.xlane.xlu0 %1744
  %v1746 = vsel %vm1015, %v1736, -inf
  %1747 = vmax.xlane.f32.xlu0 %v1746
  %v1748 = vpop.xlane.xlu0 %1747
  %v1749 = vsub.f32 %v1733, %v1739
  %v1750 = vsub.f32 %v1734, %v1742
  %v1751 = vsub.f32 %v1735, %v1745
  %v1752 = vsub.f32 %v1736, %v1748
  %v1753 = vmul.f32 %v1749, 1.442695
  %v1754 = vpow.pop %v1753
  %v1755 = vmul.f32 %v1750, 1.442695
  %v1756 = vpow.pop %v1755
  %v1757 = vmul.f32 %v1751, 1.442695
  %v1758 = vpow.pop %v1757
  %v1759 = vmul.f32 %v1752, 1.442695
  %v1760 = vpow.pop %v1759
  %v1761 = vsel %vm1015, %v1754, 0.0
  %1762 = vadd.xlane.f32.xlu0 %v1761
  %v1763 = vpop.xlane.xlu0 %1762
  %v1764 = vsel %vm1015, %v1756, 0.0
  %1765 = vadd.xlane.f32.xlu0 %v1764
  %v1766 = vpop.xlane.xlu0 %1765
  %v1767 = vsel %vm1015, %v1758, 0.0
  %1768 = vadd.xlane.f32.xlu0 %v1767
  %v1769 = vpop.xlane.xlu0 %1768
  %v1770 = vsel %vm1015, %v1760, 0.0
  %1771 = vadd.xlane.f32.xlu0 %v1770
  %v1772 = vpop.xlane.xlu0 %1771
  %v1773 = vrcp.pop %v1763
  %v1774 = vrcp.pop %v1766
  %v1775 = vrcp.pop %v1769
  %v1776 = vrcp.pop %v1772
  %v1777 = vmul.f32 %v1754, %v1773
  %v1778 = vmul.f32 %v1756, %v1774
  %v1779 = vmul.f32 %v1758, %v1775
  %v1780 = vmul.f32 %v1760, %v1776
  %v1781 = vpack.c.bf16 %v1777, %v1777
  %v1782 = vpack.c.bf16 %v1778, %v1778
  %v1783 = vpack.c.bf16 %v1779, %v1779
  %v1784 = vpack.c.bf16 %v1780, %v1780
  %v1785 = vpack.c.bf16 %v858, %v858
  %v1786 = vpack.c.bf16 %v864, %v864
  %v1787 = vpack.c.bf16 %v862, %v862
  %v1788 = vpack.c.bf16 %v866, %v866
  %v1790 = vsel %vm1087, %v1781, 0
  %v1793 = vsel %vm1091, %v1785, 0
  %1795 = vmatpush.bf16.msra.mxu0 0
  %1796 = vmatpush.bf16.msra.mxu0 0
  %1797 = vmatpush.bf16.msra.mxu0 0
  %1798 = vmatpush.bf16.msra.mxu0 0
  %1799 = vmatpush.bf16.msra.mxu0 0
  %1800 = vmatpush.bf16.msra.mxu0 0
  %1801 = vmatpush.bf16.msra.mxu0 0
  %1802 = vmatpush.bf16.msra.mxu0 %v1793
  %1803 = vmatmul.bf16.gmra.mxu0 %v1790
  %v1804 = vpop.f32.mrf.mxu0
  %v1805 = vadd.f32 0.0, %v1804
  %v1806 = vpop.f32.mrf.mxu0
  %1807 = vdwg.mxu0
  %v1809 = vsel %vm1087, %v1782, 0
  %v1812 = vsel %vm1091, %v1786, 0
  %1814 = vmatpush.bf16.msra.mxu0 0
  %1815 = vmatpush.bf16.msra.mxu0 0
  %1816 = vmatpush.bf16.msra.mxu0 0
  %1817 = vmatpush.bf16.msra.mxu0 0
  %1818 = vmatpush.bf16.msra.mxu0 0
  %1819 = vmatpush.bf16.msra.mxu0 0
  %1820 = vmatpush.bf16.msra.mxu0 0
  %1821 = vmatpush.bf16.msra.mxu0 %v1812
  %1822 = vmatmul.bf16.gmra.mxu0 %v1809
  %v1823 = vpop.f32.mrf.mxu0
  %v1824 = vadd.f32 0.0, %v1823
  %v1825 = vpop.f32.mrf.mxu0
  %1826 = vdwg.mxu0
  %v1828 = vsel %vm1087, %v1783, 0
  %v1831 = vsel %vm1091, %v1787, 0
  %1833 = vmatpush.bf16.msra.mxu0 0
  %1834 = vmatpush.bf16.msra.mxu0 0
  %1835 = vmatpush.bf16.msra.mxu0 0
  %1836 = vmatpush.bf16.msra.mxu0 0
  %1837 = vmatpush.bf16.msra.mxu0 0
  %1838 = vmatpush.bf16.msra.mxu0 0
  %1839 = vmatpush.bf16.msra.mxu0 0
  %1840 = vmatpush.bf16.msra.mxu0 %v1831
  %1841 = vmatmul.bf16.gmra.mxu0 %v1828
  %v1842 = vpop.f32.mrf.mxu0
  %v1843 = vadd.f32 0.0, %v1842
  %v1844 = vpop.f32.mrf.mxu0
  %1845 = vdwg.mxu0
  %v1847 = vsel %vm1087, %v1784, 0
  %v1850 = vsel %vm1091, %v1788, 0
  %1852 = vmatpush.bf16.msra.mxu0 0
  %1853 = vmatpush.bf16.msra.mxu0 0
  %1854 = vmatpush.bf16.msra.mxu0 0
  %1855 = vmatpush.bf16.msra.mxu0 0
  %1856 = vmatpush.bf16.msra.mxu0 0
  %1857 = vmatpush.bf16.msra.mxu0 0
  %1858 = vmatpush.bf16.msra.mxu0 0
  %1859 = vmatpush.bf16.msra.mxu0 %v1850
  %1860 = vmatmul.bf16.gmra.mxu0 %v1847
  %v1861 = vpop.f32.mrf.mxu0
  %v1862 = vadd.f32 0.0, %v1861
  %v1863 = vpop.f32.mrf.mxu0
  %1864 = vdwg.mxu0
  %v1865 = vrot.slane %v1843, 4
  %v1866 = vsel %vm738, %v1865, %v1805
  %v1868 = vunpack.c.l.s4 1983009808
  %v1869 = vunpack.c.0.s8 %v1868
  %v1870 = vperm.slane %v1866, %v1869
  %v1871 = vrot.slane %v1862, 4
  %v1872 = vsel %vm738, %v1871, %v1824
  %v1874 = vunpack.c.l.s4 1983009808
  %v1875 = vunpack.c.0.s8 %v1874
  %v1876 = vperm.slane %v1872, %v1875
  %v1877 = vrot.slane %v1876, 4
  %v1878 = vsel %vm738, %v1877, %v1870
  %v1880 = vunpack.c.l.s4 1934713408
  %v1881 = vunpack.c.0.s8 %v1880
  %v1882 = vperm.slane %v1878, %v1881
  %v1883 = vrot.slane %v1882, 4
  %v1884 = vsel %vm738, 0.0, %v1883
  %1887 = vst [vmem:[#allocation1] ss:$2 sm:$0xff] %v1882
  %s1888 = scalar_lea.vmem [#allocation1], 1
  %1889 = vst [vmem:[%s1888] ss:$2 sm:$0xff] %v1884
  %v1890 = vld.sshfl [vmem:[#allocation1] sm:$0xff pattern:$0x75316420]
  %v1892 = vpack.c.bf16 %v1890, %v1890
  %v1901 = vunpack.c.l.b16 %v883
  %v1902 = vunpack.c.h.b16 %v883
  %v1903 = vunpack.c.l.b16 %v884
  %v1904 = vunpack.c.h.b16 %v884
  %v1905 = vunpack.c.l.b16 %v885
  %v1906 = vunpack.c.h.b16 %v885
  %v1907 = vunpack.c.l.b16 %v886
  %v1908 = vunpack.c.h.b16 %v886
  %v1909 = vunpack.c.l.b16 %v887
  %v1910 = vunpack.c.h.b16 %v887
  %v1911 = vunpack.c.l.b16 %v888
  %v1912 = vunpack.c.h.b16 %v888
  %v1913 = vunpack.c.l.b16 %v889
  %v1914 = vunpack.c.h.b16 %v889
  %v1915 = vunpack.c.l.b16 %v890
  %v1916 = vunpack.c.h.b16 %v890
  %v1917 = vpack.c.b16 %v1903, %v1901
  %v1918 = vpack.c.b16 %v1904, %v1902
  %v1919 = vpack.c.b16 %v1907, %v1905
  %v1920 = vpack.c.b16 %v1908, %v1906
  %v1921 = vpack.c.b16 %v1911, %v1909
  %v1922 = vpack.c.b16 %v1912, %v1910
  %v1923 = vpack.c.b16 %v1915, %v1913
  %v1924 = vpack.c.b16 %v1916, %v1914
  %v1934 = vsel %vm934, %v1892, 0
  %1936 = vmatpush.bf16.msra.mxu0 0
  %1937 = vmatpush.bf16.msra.mxu0 0
  %1938 = vmatpush.bf16.msra.mxu0 0
  %1939 = vmatpush.bf16.msra.mxu0 0
  %1940 = vmatpush.bf16.msra.mxu0 %v1923
  %1941 = vmatpush.bf16.msra.mxu0 %v1921
  %1942 = vmatpush.bf16.msra.mxu0 %v1919
  %1943 = vmatpush.bf16.msra.mxu0 %v1917
  %1944 = vmatmul.bf16.gmra.mxu0 %v1934
  %v1945 = vpop.f32.mrf.mxu0
  %v1946 = vadd.f32 0.0, %v1945
  %v1947 = vpop.f32.mrf.mxu0
  %1948 = vdwg.mxu0
  %1949 = vmatpush.bf16.msra.mxu0 0
  %1950 = vmatpush.bf16.msra.mxu0 0
  %1951 = vmatpush.bf16.msra.mxu0 0
  %1952 = vmatpush.bf16.msra.mxu0 0
  %1953 = vmatpush.bf16.msra.mxu0 %v1924
  %1954 = vmatpush.bf16.msra.mxu0 %v1922
  %1955 = vmatpush.bf16.msra.mxu0 %v1920
  %1956 = vmatpush.bf16.msra.mxu0 %v1918
  %1957 = vmatmul.bf16.gmra.mxu0 %v1934
  %v1958 = vpop.f32.mrf.mxu0
  %v1959 = vadd.f32 0.0, %v1958
  %v1960 = vpop.f32.mrf.mxu0
  %1961 = vdwg.mxu0
  %v1962 = vadd.f32 %v1616, %v1946
  %v1963 = vadd.f32 %v1617, %v1959
  %1964 = vst [vmem:[%s6] sm:$0xff] %v1962
  %1965 = vst [vmem:[%s6 + $0x8] sm:$0xff] %v1963
  // Predicated region
  $region26: #{shuffle_attention_2d.1} parent=0 // pred_check
    _
  $region27: #{shuffle_attention_2d.1} parent=0 // pred_check_branch
    %1967 = sbr.rel (0) target = $region29
  $region28: #{shuffle_attention_2d.1} parent=0 // pred_region
    _
  $region29: #{shuffle_attention_2d.1} parent=0 // pred_fallthru
    _
  // Predicated region
  $region30: #{shuffle_attention_2d.1} parent=0 // pred_check
    _
  $region31: #{shuffle_attention_2d.1} parent=0 // pred_check_branch
    %1969 = sbr.rel (0) target = $region33
  $region32: #{shuffle_attention_2d.1} parent=0 // pred_region
    _
  $region33: #{shuffle_attention_2d.1} parent=0 // pred_fallthru
    _

</llo_original>
